<compile_context>
chip_gen: v7x
topology: tpu7x:2x2x1
jax: 0.10.0
libtpu: 0.0.40
codegen_flags: <defaults>
</compile_context>

<pallas_src>
import jax
import jax.numpy as jnp
from jax.experimental import pallas as pl
from jax.experimental.pallas import tpu as pltpu


# ---------------------------------------------------------------------------
# in-kernel activation helpers (EUP-friendly)
# ---------------------------------------------------------------------------
def _sigmoid_kernel(v):
    # exp -> EUP, approx reciprocal -> EUP; keeps the divide off the saturated VALU slot.
    return pl.reciprocal(1.0 + jnp.exp(-v), approx=True)


def _swish_kernel(v):
    return v * _sigmoid_kernel(v)


# ---------------------------------------------------------------------------
# stage 1: expand + depthwise (+ partial global average pool)
# ---------------------------------------------------------------------------
def _make_stage1_kernel(*, H, W, Cin, ch, k, stride, expansion, TR):
    p = (k - 1) // 2
    Wout = (W + 2 * p - k) // stride + 1
    rows_in = (TR - 1) * stride + k          # input rows (incl. halo) per output-row tile
    row_step = TR * stride

    def kernel(*refs):
        it = iter(refs)
        x_ref = next(it)                      # (1, H+2p, W, Cin)  row-padded input, one image
        if expansion != 1:
            w_exp_ref = next(it)              # (Cin, ch) bf16, BN0 scale folded
            b0_ref = next(it)                 # (1, ch)  f32
        w_dw_ref = next(it)                   # (k*k, ch) f32, BN1 scale folded
        b1_ref = next(it)                     # (1, ch)  f32
        h_ref = next(it)                      # out: (1, TR, Wout, ch) f32
        sum_ref = next(it)                    # out: (1, 1, ch) f32  pooled-sum accumulator
        ex_ref = next(it)                     # scratch: (rows_in, W+2p, ch) f32

        r = pl.program_id(1)
        row0 = pl.multiple_of(r * row_step, row_step)   # first padded input row of this tile

        # ---- expand 1x1 conv (+ folded BN0 + swish) on the halo'd row window ----
        xt = x_ref[0, pl.ds(row0, rows_in), :, :]       # (rows_in, W, Cin)
        if expansion != 1:
            xf = xt.reshape(rows_in * W, Cin).astype(jnp.bfloat16)
            ex = jnp.dot(xf, w_exp_ref[...], preferred_element_type=jnp.float32)
            ex = _swish_kernel(ex + b0_ref[0])
            ex = ex.reshape(rows_in, W, ch)
            # Depthwise padding applies to the *expanded* map (as in PyTorch), so rows that
            # came from the wrapper-side zero row padding must be forced back to exactly 0.
            if p > 0:
                rows = row0 + jax.lax.broadcasted_iota(jnp.int32, (rows_in, 1, 1), 0)
                rmask = ((rows >= p) & (rows < H + p)).astype(jnp.float32)
                ex = ex * rmask
        else:
            ex = xt                                     # ch == Cin; padded rows already zero

        # zero only the left/right halo columns of the scratch; interior written once below
        if p > 0:
            ex_ref[:, 0:p, :] = jnp.zeros((rows_in, p, ch), jnp.float32)
            ex_ref[:, p + W:, :] = jnp.zeros((rows_in, p, ch), jnp.float32)
        ex_ref[:, p:p + W, :] = ex

        # ---- depthwise kxk conv (+ folded BN1 + swish), tile-resident accumulation ----
        w_dw = w_dw_ref[...]                            # (k*k, ch)
        acc = jnp.zeros((TR, Wout, ch), jnp.float32)
        for dy in range(k):
            for dx in range(k):
                if stride == 1:
                    tap = ex_ref[dy:dy + TR, dx:dx + Wout, :]
                else:
                    win = ex_ref[dy:dy + (TR - 1) * stride + 1,
                                 dx:dx + (Wout - 1) * stride + 1, :]
                    tap = win[::stride, ::stride, :]
                acc = acc + tap * w_dw[dy * k + dx]
        h_tile = _swish_kernel(acc + b1_ref[0])         # (TR, Wout, ch)

        h_ref[0] = h_tile

        # ---- partial global average pool (two-pass squeeze & excite, pass 1) ----
        part = jnp.sum(jnp.sum(h_tile, axis=0), axis=0)  # (ch,)

        @pl.when(r == 0)
        def _():
            sum_ref[...] = jnp.zeros_like(sum_ref)

        sum_ref[...] = sum_ref[...] + part[None, None, :]

    return kernel, rows_in, Wout


# ---------------------------------------------------------------------------
# stage 2: SE FCs + SE scaling + project 1x1 (+ skip)
# ---------------------------------------------------------------------------
def _make_stage2_kernel(*, Hout, Wout, ch, Cin, Cout, TR, id_skip):
    inv_hw = 1.0 / float(Hout * Wout)

    def kernel(*refs):
        it = iter(refs)
        sum_ref = next(it)                    # (1, 1, ch) pooled sums for this image
        h_ref = next(it)                      # (1, TR, Wout, ch)
        if id_skip:
            x_ref = next(it)                  # (1, TR, Wout, Cin)  (Cin == Cout, Wout == W)
        w_ser_ref = next(it)                  # (ch, cse) bf16
        b_ser_ref = next(it)                  # (1, cse)  f32
        w_see_ref = next(it)                  # (cse, ch) bf16
        b_see_ref = next(it)                  # (1, ch)   f32
        w_proj_ref = next(it)                 # (ch, Cout) bf16, BN2 scale folded
        b2_ref = next(it)                     # (1, Cout) f32
        out_ref = next(it)                    # out: (1, TR*Wout, Cout) f32
        se_ref = next(it)                     # scratch: (1, ch) f32

        r = pl.program_id(1)

        # ---- squeeze & excite FCs: once per image (r == 0), reused for r > 0 ----
        @pl.when(r == 0)
        def _():
            mean = sum_ref[0] * inv_hw                                   # (1, ch)
            t = jnp.dot(mean.astype(jnp.bfloat16), w_ser_ref[...],
                        preferred_element_type=jnp.float32) + b_ser_ref[...]
            t = _swish_kernel(t)
            s = jnp.dot(t.astype(jnp.bfloat16), w_see_ref[...],
                        preferred_element_type=jnp.float32) + b_see_ref[...]
            se_ref[...] = _sigmoid_kernel(s)

        h = h_ref[0] * se_ref[0]                                         # (TR, Wout, ch)

        # ---- project 1x1 conv (+ folded BN2) (+ identity skip) ----
        hf = h.reshape(TR * Wout, ch).astype(jnp.bfloat16)
        out = jnp.dot(hf, w_proj_ref[...], preferred_element_type=jnp.float32) + b2_ref[0]
        if id_skip:
            out = out + x_ref[0].reshape(TR * Wout, Cin)
        out_ref[0] = out

    return kernel


# ---------------------------------------------------------------------------
# public wrapper (NCHW in / NCHW out, same as the PyTorch module)
# ---------------------------------------------------------------------------
def mbconv_pallas(x_nchw, params, *, in_ch, out_ch, expansion, kernel_size, stride,
                  tile_rows=8):
    N, Cin, H, W = x_nchw.shape
    assert Cin == in_ch
    ch = expansion * in_ch
    cse = in_ch // 4
    k = kernel_size
    p = (k - 1) // 2
    Hout = (H + 2 * p - k) // stride + 1
    Wout = (W + 2 * p - k) // stride + 1
    id_skip = (stride == 1 and in_ch == out_ch)

    assert W % 8 == 0 and Wout % 8 == 0, \
        "W and Wout must be multiples of 8 (layout-preserving in-kernel reshapes)"

    # output-row tile size: largest divisor of Hout that is <= tile_rows
    TR = 1
    for t in range(1, min(tile_rows, Hout) + 1):
        if Hout % t == 0:
            TR = t
    R = Hout // TR

    x_nhwc = jnp.transpose(x_nchw, (0, 2, 3, 1)).astype(jnp.float32)   # NCHW -> NHWC
    x_rpad = jnp.pad(x_nhwc, ((0, 0), (p, p), (0, 0), (0, 0)))         # zero-pad rows only

    # ---- fold eval-mode BN scales into conv weights (bias adds stay in-kernel) ----
    if expansion != 1:
        w_exp = (params['w_exp'] * params['s0']).astype(jnp.bfloat16)  # (Cin, ch)
        b0 = params['b0']
    w_dw = params['w_dw'] * params['s1']                               # (k*k, ch) f32 (VPU)
    b1 = params['b1']
    w_ser = params['w_se_r'].astype(jnp.bfloat16)                      # (ch, cse)
    b_ser = params['b_se_r']
    w_see = params['w_se_e'].astype(jnp.bfloat16)                      # (cse, ch)
    b_see = params['b_se_e']
    w_proj = (params['w_proj'] * params['s2']).astype(jnp.bfloat16)    # (ch, Cout)
    b2 = params['b2']

    cparams = pltpu.CompilerParams(dimension_semantics=("parallel", "arbitrary"),
                                   vmem_limit_bytes=48 * 1024 * 1024)

    # ------------------------- stage 1 -------------------------
    k1, rows_in, _ = _make_stage1_kernel(H=H, W=W, Cin=Cin, ch=ch, k=k,
                                         stride=stride, expansion=expansion, TR=TR)
    in_specs1 = [pl.BlockSpec((1, H + 2 * p, W, Cin), lambda n, r: (n, 0, 0, 0))]
    args1 = [x_rpad]
    if expansion != 1:
        in_specs1 += [pl.BlockSpec((Cin, ch), lambda n, r: (0, 0)),
                      pl.BlockSpec((1, ch), lambda n, r: (0, 0))]
        args1 += [w_exp, b0]
    in_specs1 += [pl.BlockSpec((k * k, ch), lambda n, r: (0, 0)),
                  pl.BlockSpec((1, ch), lambda n, r: (0, 0))]
    args1 += [w_dw, b1]

    h, pooled = pl.pallas_call(
        k1,
        grid=(N, R),
        in_specs=in_specs1,
        out_specs=(pl.BlockSpec((1, TR, Wout, ch), lambda n, r: (n, r, 0, 0)),
                   pl.BlockSpec((1, 1, ch), lambda n, r: (n, 0, 0))),
        out_shape=(jax.ShapeDtypeStruct((N, Hout, Wout, ch), jnp.float32),
                   jax.ShapeDtypeStruct((N, 1, ch), jnp.float32)),
        scratch_shapes=[pltpu.VMEM((rows_in, W + 2 * p, ch), jnp.float32)],
        compiler_params=cparams,
    )(*args1)

    # ------------------------- stage 2 -------------------------
    k2 = _make_stage2_kernel(Hout=Hout, Wout=Wout, ch=ch, Cin=Cin, Cout=out_ch,
                             TR=TR, id_skip=id_skip)
    in_specs2 = [pl.BlockSpec((1, 1, ch), lambda n, r: (n, 0, 0)),
                 pl.BlockSpec((1, TR, Wout, ch), lambda n, r: (n, r, 0, 0))]
    args2 = [pooled, h]
    if id_skip:
        in_specs2.append(pl.BlockSpec((1, TR, W, Cin), lambda n, r: (n, r, 0, 0)))
        args2.append(x_nhwc)
    in_specs2 += [pl.BlockSpec((ch, cse), lambda n, r: (0, 0)),
                  pl.BlockSpec((1, cse), lambda n, r: (0, 0)),
                  pl.BlockSpec((cse, ch), lambda n, r: (0, 0)),
                  pl.BlockSpec((1, ch), lambda n, r: (0, 0)),
                  pl.BlockSpec((ch, out_ch), lambda n, r: (0, 0)),
                  pl.BlockSpec((1, out_ch), lambda n, r: (0, 0))]
    args2 += [w_ser, b_ser, w_see, b_see, w_proj, b2]

    out_flat = pl.pallas_call(
        k2,
        grid=(N, R),
        in_specs=in_specs2,
        out_specs=pl.BlockSpec((1, TR * Wout, out_ch), lambda n, r: (n, r, 0)),
        out_shape=jax.ShapeDtypeStruct((N, Hout * Wout, out_ch), jnp.float32),
        scratch_shapes=[pltpu.VMEM((1, ch), jnp.float32)],
        compiler_params=cparams,
    )(*args2)

    out = out_flat.reshape(N, Hout, Wout, out_ch)
    return jnp.transpose(out, (0, 3, 1, 2))              # back to NCHW


# ---------------------------------------------------------------------------
# synthetic parameters + pure-JAX fp32 reference (unfused BN, mirrors PyTorch eval)
# ---------------------------------------------------------------------------
def _sigmoid(v):
    return 1.0 / (1.0 + jnp.exp(-v))


def init_params(key, in_ch, out_ch, expansion, kernel_size, eps=1e-3):
    ch = expansion * in_ch
    cse = in_ch // 4
    keys = jax.random.split(key, 20)

    def bn(kg, kb, km, kv, c):
        gamma = 1.0 + 0.1 * jax.random.normal(kg, (c,), jnp.float32)
        beta = 0.1 * jax.random.normal(kb, (c,), jnp.float32)
        mean = 0.1 * jax.random.normal(km, (c,), jnp.float32)
        var = jax.random.uniform(kv, (c,), jnp.float32, 0.5, 1.5)
        scale = gamma / jnp.sqrt(var + eps)
        bias = beta - mean * scale
        return scale.reshape(1, c), bias.reshape(1, c)

    p = {}
    if expansion != 1:
        p['w_exp'] = 0.3 * jax.random.normal(keys[0], (in_ch, ch), jnp.float32)
        p['s0'], p['b0'] = bn(keys[1], keys[2], keys[3], keys[4], ch)
    p['w_dw'] = 0.3 * jax.random.normal(keys[5], (kernel_size * kernel_size, ch), jnp.float32)
    p['s1'], p['b1'] = bn(keys[6], keys[7], keys[8], keys[9], ch)
    p['w_se_r'] = 0.3 * jax.random.normal(keys[10], (ch, cse), jnp.float32)
    p['b_se_r'] = 0.1 * jax.random.normal(keys[11], (1, cse), jnp.float32)
    p['w_se_e'] = 0.3 * jax.random.normal(keys[12], (cse, ch), jnp.float32)
    p['b_se_e'] = 0.1 * jax.random.normal(keys[13], (1, ch), jnp.float32)
    p['w_proj'] = 0.3 * jax.random.normal(keys[14], (ch, out_ch), jnp.float32)
    p['s2'], p['b2'] = bn(keys[15], keys[16], keys[17], keys[18], out_ch)
    return p


def mbconv_ref(x_nchw, params, *, in_ch, out_ch, expansion, kernel_size, stride):
    N, Cin, H, W = x_nchw.shape
    ch = expansion * in_ch
    k = kernel_size
    pad = (k - 1) // 2
    x = jnp.transpose(x_nchw, (0, 2, 3, 1)).astype(jnp.float32)
    ex = x
    if expansion != 1:
        ex = jnp.einsum('nhwc,cd->nhwd', x, params['w_exp'])
        ex = ex * params['s0'][0] + params['b0'][0]
        ex = ex * _sigmoid(ex)
    xp = jnp.pad(ex, ((0, 0), (pad, pad), (pad, pad), (0, 0)))
    Hout = (H + 2 * pad - k) // stride + 1
    Wout = (W + 2 * pad - k) // stride + 1
    acc = jnp.zeros((N, Hout, Wout, ch), jnp.float32)
    for dy in range(k):
        for dx in range(k):
            tap = xp[:, dy:dy + (Hout - 1) * stride + 1:stride,
                     dx:dx + (Wout - 1) * stride + 1:stride, :]
            acc = acc + tap * params['w_dw'][dy * k + dx]
    h = acc * params['s1'][0] + params['b1'][0]
    h = h * _sigmoid(h)
    se = jnp.mean(h, axis=(1, 2))
    se = se @ params['w_se_r'] + params['b_se_r'][0]
    se = se * _sigmoid(se)
    se = _sigmoid(se @ params['w_se_e'] + params['b_se_e'][0])
    h = h * se[:, None, None, :]
    out = jnp.einsum('nhwc,cd->nhwd', h, params['w_proj'])
    out = out * params['s2'][0] + params['b2'][0]
    if stride == 1 and in_ch == out_ch:
        out = out + x
    return jnp.transpose(out, (0, 3, 1, 2))


if __name__ == "__main__":
    # MBConv config: in=8, out=8, expansion=4 (ch=32), 3x3 depthwise, stride=1
    # (exercises the expand, depthwise, SE, project and identity-skip paths).
    in_ch, out_ch, expansion, kernel_size, stride = 8, 8, 4, 3, 1
    N, H, W = 2, 16, 16

    key = jax.random.PRNGKey(0)
    kx, kp = jax.random.split(key)
    x = jax.random.normal(kx, (N, in_ch, H, W), jnp.float32)
    params = init_params(kp, in_ch, out_ch, expansion, kernel_size)

    out = mbconv_pallas(x, params, in_ch=in_ch, out_ch=out_ch,
                        expansion=expansion, kernel_size=kernel_size, stride=stride)
    out = jax.block_until_ready(out)

    ref = mbconv_ref(x, params, in_ch=in_ch, out_ch=out_ch,
                     expansion=expansion, kernel_size=kernel_size, stride=stride)
    assert out.shape == (N, out_ch, H, W)
    err = float(jnp.max(jnp.abs(out - ref)))
    # kernel uses bf16 MXU operands + approx-reciprocal sigmoid; reference is pure fp32
    assert jnp.allclose(out, ref, atol=1e-1, rtol=1e-1), f"max abs err {err}"
    print("KERNEL_OK")
</pallas_src>

<mosaic_0001>
module attributes {stable_mosaic.version = 11 : i64} {
  func.func @kernel(%arg0: i32, %arg1: i32, %arg2: memref<1x18x16x8xf32, #tpu.memory_space<vmem>>, %arg3: memref<8x32xbf16, #tpu.memory_space<vmem>>, %arg4: memref<1x32xf32, #tpu.memory_space<vmem>>, %arg5: memref<9x32xf32, #tpu.memory_space<vmem>>, %arg6: memref<1x32xf32, #tpu.memory_space<vmem>>, %arg7: memref<1x8x16x32xf32, #tpu.memory_space<vmem>>, %arg8: memref<1x1x32xf32, #tpu.memory_space<vmem>>, %arg9: memref<10x18x32xf32, #tpu.memory_space<vmem>>) attributes {dimension_semantics = [#tpu.dimension_semantics<parallel>, #tpu.dimension_semantics<arbitrary>], iteration_bounds = array<i64: 2, 2>, scalar_prefetch = 0 : i64, scratch_operands = 1 : i64, tpu.core_type = #tpu.core_type<tc>, window_params = [{transform_indices = @transform_0, window_bounds = array<i64: 1, 18, 16, 8>}, {pipeline_mode = #tpu.pipeline_mode<synchronous>, transform_indices = @transform_1, window_bounds = array<i64: 8, 32>}, {pipeline_mode = #tpu.pipeline_mode<synchronous>, transform_indices = @transform_2, window_bounds = array<i64: 1, 32>}, {pipeline_mode = #tpu.pipeline_mode<synchronous>, transform_indices = @transform_3, window_bounds = array<i64: 9, 32>}, {pipeline_mode = #tpu.pipeline_mode<synchronous>, transform_indices = @transform_4, window_bounds = array<i64: 1, 32>}, {transform_indices = @transform_5, window_bounds = array<i64: 1, 8, 16, 32>}, {transform_indices = @transform_6, window_bounds = array<i64: 1, 1, 32>}]} {
    %c8_i32 = arith.constant 8 : i32
    %0 = arith.muli %arg1, %c8_i32 : i32
    %1 = tpu.assume_multiple %0, 8 : i32
    %c0 = arith.constant 0 : index
    %2 = arith.index_cast %1 : i32 to index
    %c0_0 = arith.constant 0 : index
    %c0_1 = arith.constant 0 : index
    %3 = vector.load %arg2[%c0, %2, %c0_0, %c0_1] : memref<1x18x16x8xf32, #tpu.memory_space<vmem>>, vector<1x10x16x8xf32>
    %4 = vector.shape_cast %3 : vector<1x10x16x8xf32> to vector<10x16x8xf32>
    %5 = vector.shape_cast %4 : vector<10x16x8xf32> to vector<160x8xf32>
    %6 = arith.truncf %5 : vector<160x8xf32> to vector<160x8xbf16>
    %c0_2 = arith.constant 0 : index
    %c0_3 = arith.constant 0 : index
    %7 = vector.load %arg3[%c0_2, %c0_3] : memref<8x32xbf16, #tpu.memory_space<vmem>>, vector<8x32xbf16>
    %cst = arith.constant dense<0.000000e+00> : vector<160x32xf32>
    %8 = tpu.matmul %6, %7, %cst {dimension_numbers = #tpu.dot_dimension_numbers<[1], [0], [0], [1], [0, 0, 1, 1], [], []>} : vector<160x8xbf16>, vector<8x32xbf16>, vector<160x32xf32> -> vector<160x32xf32>
    %c0_4 = arith.constant 0 : index
    %c0_5 = arith.constant 0 : index
    %9 = vector.load %arg4[%c0_4, %c0_5] : memref<1x32xf32, #tpu.memory_space<vmem>>, vector<1x32xf32>
    %10 = vector.shape_cast %9 : vector<1x32xf32> to vector<32xf32>
    %11 = vector.shape_cast %10 : vector<32xf32> to vector<1x32xf32>
    %12 = vector.broadcast %11 : vector<1x32xf32> to vector<160x32xf32>
    %13 = arith.addf %8, %12 : vector<160x32xf32>
    %cst_6 = arith.constant 0.000000e+00 : f32
    %14 = vector.broadcast %cst_6 : f32 to vector<160x32xf32>
    %15 = arith.subf %14, %13 : vector<160x32xf32>
    %16 = math.exp %15 : vector<160x32xf32>
    %cst_7 = arith.constant 1.000000e+00 : f32
    %17 = vector.broadcast %cst_7 : f32 to vector<160x32xf32>
    %18 = arith.addf %17, %16 : vector<160x32xf32>
    %19 = tpu.reciprocal %18 {approx = true} : vector<160x32xf32> -> vector<160x32xf32>
    %20 = arith.mulf %13, %19 : vector<160x32xf32>
    %21 = vector.shape_cast %20 : vector<160x32xf32> to vector<10x16x32xf32>
    %22 = tpu.iota {dimensions = array<i32: 0>} : vector<10x1x1xi32>
    %23 = vector.broadcast %1 : i32 to vector<10x1x1xi32>
    %24 = arith.addi %23, %22 : vector<10x1x1xi32>
    %c1_i32 = arith.constant 1 : i32
    %25 = vector.broadcast %c1_i32 : i32 to vector<10x1x1xi32>
    %26 = arith.cmpi sge, %24, %25 : vector<10x1x1xi32>
    %c17_i32 = arith.constant 17 : i32
    %27 = vector.broadcast %c17_i32 : i32 to vector<10x1x1xi32>
    %28 = arith.cmpi slt, %24, %27 : vector<10x1x1xi32>
    %29 = arith.andi %26, %28 : vector<10x1x1xi1>
    %30 = arith.extui %29 : vector<10x1x1xi1> to vector<10x1x1xi32>
    %31 = arith.sitofp %30 : vector<10x1x1xi32> to vector<10x1x1xf32>
    %32 = vector.broadcast %31 : vector<10x1x1xf32> to vector<10x16x32xf32>
    %33 = arith.mulf %21, %32 : vector<10x16x32xf32>
    %cst_8 = arith.constant 0.000000e+00 : f32
    %34 = vector.broadcast %cst_8 : f32 to vector<10x1x32xf32>
    %c0_9 = arith.constant 0 : index
    %c0_10 = arith.constant 0 : index
    %c0_11 = arith.constant 0 : index
    %35 = vector.load %arg9[%c0_9, %c0_10, %c0_11] : memref<10x18x32xf32, #tpu.memory_space<vmem>>, vector<10x1x32xf32>
    tpu.vector_store %arg9[%c0_9, %c0_10, %c0_11], %34 {strides = array<i32>} : memref<10x18x32xf32, #tpu.memory_space<vmem>>, vector<10x1x32xf32>,
    %cst_12 = arith.constant 0.000000e+00 : f32
    %36 = vector.broadcast %cst_12 : f32 to vector<10x1x32xf32>
    %c0_13 = arith.constant 0 : index
    %c17 = arith.constant 17 : index
    %c0_14 = arith.constant 0 : index
    %37 = vector.load %arg9[%c0_13, %c17, %c0_14] : memref<10x18x32xf32, #tpu.memory_space<vmem>>, vector<10x1x32xf32>
    tpu.vector_store %arg9[%c0_13, %c17, %c0_14], %36 {strides = array<i32>} : memref<10x18x32xf32, #tpu.memory_space<vmem>>, vector<10x1x32xf32>,
    %c0_15 = arith.constant 0 : index
    %c1 = arith.constant 1 : index
    %c0_16 = arith.constant 0 : index
    %38 = vector.load %arg9[%c0_15, %c1, %c0_16] : memref<10x18x32xf32, #tpu.memory_space<vmem>>, vector<10x16x32xf32>
    tpu.vector_store %arg9[%c0_15, %c1, %c0_16], %33 {strides = array<i32>} : memref<10x18x32xf32, #tpu.memory_space<vmem>>, vector<10x16x32xf32>,
    %c0_17 = arith.constant 0 : index
    %c0_18 = arith.constant 0 : index
    %39 = vector.load %arg5[%c0_17, %c0_18] : memref<9x32xf32, #tpu.memory_space<vmem>>, vector<9x32xf32>
    %cst_19 = arith.constant 0.000000e+00 : f32
    %40 = vector.broadcast %cst_19 : f32 to vector<8x16x32xf32>
    %c0_20 = arith.constant 0 : index
    %c0_21 = arith.constant 0 : index
    %c0_22 = arith.constant 0 : index
    %41 = vector.load %arg9[%c0_20, %c0_21, %c0_22] : memref<10x18x32xf32, #tpu.memory_space<vmem>>, vector<8x16x32xf32>
    %42 = vector.extract_strided_slice %39 {offsets = [0, 0], sizes = [1, 32], strides = [1, 1]} : vector<9x32xf32> to vector<1x32xf32>
    %43 = vector.shape_cast %42 : vector<1x32xf32> to vector<32xf32>
    %44 = vector.shape_cast %43 : vector<32xf32> to vector<1x1x32xf32>
    %45 = vector.broadcast %44 : vector<1x1x32xf32> to vector<8x16x32xf32>
    %46 = arith.mulf %41, %45 : vector<8x16x32xf32>
    %47 = arith.addf %40, %46 : vector<8x16x32xf32>
    %c0_23 = arith.constant 0 : index
    %c1_24 = arith.constant 1 : index
    %c0_25 = arith.constant 0 : index
    %48 = vector.load %arg9[%c0_23, %c1_24, %c0_25] : memref<10x18x32xf32, #tpu.memory_space<vmem>>, vector<8x16x32xf32>
    %49 = vector.extract_strided_slice %39 {offsets = [1, 0], sizes = [1, 32], strides = [1, 1]} : vector<9x32xf32> to vector<1x32xf32>
    %50 = vector.shape_cast %49 : vector<1x32xf32> to vector<32xf32>
    %51 = vector.shape_cast %50 : vector<32xf32> to vector<1x1x32xf32>
    %52 = vector.broadcast %51 : vector<1x1x32xf32> to vector<8x16x32xf32>
    %53 = arith.mulf %48, %52 : vector<8x16x32xf32>
    %54 = arith.addf %47, %53 : vector<8x16x32xf32>
    %c0_26 = arith.constant 0 : index
    %c2 = arith.constant 2 : index
    %c0_27 = arith.constant 0 : index
    %55 = vector.load %arg9[%c0_26, %c2, %c0_27] : memref<10x18x32xf32, #tpu.memory_space<vmem>>, vector<8x16x32xf32>
    %56 = vector.extract_strided_slice %39 {offsets = [2, 0], sizes = [1, 32], strides = [1, 1]} : vector<9x32xf32> to vector<1x32xf32>
    %57 = vector.shape_cast %56 : vector<1x32xf32> to vector<32xf32>
    %58 = vector.shape_cast %57 : vector<32xf32> to vector<1x1x32xf32>
    %59 = vector.broadcast %58 : vector<1x1x32xf32> to vector<8x16x32xf32>
    %60 = arith.mulf %55, %59 : vector<8x16x32xf32>
    %61 = arith.addf %54, %60 : vector<8x16x32xf32>
    %c1_28 = arith.constant 1 : index
    %c0_29 = arith.constant 0 : index
    %c0_30 = arith.constant 0 : index
    %62 = vector.load %arg9[%c1_28, %c0_29, %c0_30] : memref<10x18x32xf32, #tpu.memory_space<vmem>>, vector<8x16x32xf32>
    %63 = vector.extract_strided_slice %39 {offsets = [3, 0], sizes = [1, 32], strides = [1, 1]} : vector<9x32xf32> to vector<1x32xf32>
    %64 = vector.shape_cast %63 : vector<1x32xf32> to vector<32xf32>
    %65 = vector.shape_cast %64 : vector<32xf32> to vector<1x1x32xf32>
    %66 = vector.broadcast %65 : vector<1x1x32xf32> to vector<8x16x32xf32>
    %67 = arith.mulf %62, %66 : vector<8x16x32xf32>
    %68 = arith.addf %61, %67 : vector<8x16x32xf32>
    %c1_31 = arith.constant 1 : index
    %c1_32 = arith.constant 1 : index
    %c0_33 = arith.constant 0 : index
    %69 = vector.load %arg9[%c1_31, %c1_32, %c0_33] : memref<10x18x32xf32, #tpu.memory_space<vmem>>, vector<8x16x32xf32>
    %70 = vector.extract_strided_slice %39 {offsets = [4, 0], sizes = [1, 32], strides = [1, 1]} : vector<9x32xf32> to vector<1x32xf32>
    %71 = vector.shape_cast %70 : vector<1x32xf32> to vector<32xf32>
    %72 = vector.shape_cast %71 : vector<32xf32> to vector<1x1x32xf32>
    %73 = vector.broadcast %72 : vector<1x1x32xf32> to vector<8x16x32xf32>
    %74 = arith.mulf %69, %73 : vector<8x16x32xf32>
    %75 = arith.addf %68, %74 : vector<8x16x32xf32>
    %c1_34 = arith.constant 1 : index
    %c2_35 = arith.constant 2 : index
    %c0_36 = arith.constant 0 : index
    %76 = vector.load %arg9[%c1_34, %c2_35, %c0_36] : memref<10x18x32xf32, #tpu.memory_space<vmem>>, vector<8x16x32xf32>
    %77 = vector.extract_strided_slice %39 {offsets = [5, 0], sizes = [1, 32], strides = [1, 1]} : vector<9x32xf32> to vector<1x32xf32>
    %78 = vector.shape_cast %77 : vector<1x32xf32> to vector<32xf32>
    %79 = vector.shape_cast %78 : vector<32xf32> to vector<1x1x32xf32>
    %80 = vector.broadcast %79 : vector<1x1x32xf32> to vector<8x16x32xf32>
    %81 = arith.mulf %76, %80 : vector<8x16x32xf32>
    %82 = arith.addf %75, %81 : vector<8x16x32xf32>
    %c2_37 = arith.constant 2 : index
    %c0_38 = arith.constant 0 : index
    %c0_39 = arith.constant 0 : index
    %83 = vector.load %arg9[%c2_37, %c0_38, %c0_39] : memref<10x18x32xf32, #tpu.memory_space<vmem>>, vector<8x16x32xf32>
    %84 = vector.extract_strided_slice %39 {offsets = [6, 0], sizes = [1, 32], strides = [1, 1]} : vector<9x32xf32> to vector<1x32xf32>
    %85 = vector.shape_cast %84 : vector<1x32xf32> to vector<32xf32>
    %86 = vector.shape_cast %85 : vector<32xf32> to vector<1x1x32xf32>
    %87 = vector.broadcast %86 : vector<1x1x32xf32> to vector<8x16x32xf32>
    %88 = arith.mulf %83, %87 : vector<8x16x32xf32>
    %89 = arith.addf %82, %88 : vector<8x16x32xf32>
    %c2_40 = arith.constant 2 : index
    %c1_41 = arith.constant 1 : index
    %c0_42 = arith.constant 0 : index
    %90 = vector.load %arg9[%c2_40, %c1_41, %c0_42] : memref<10x18x32xf32, #tpu.memory_space<vmem>>, vector<8x16x32xf32>
    %91 = vector.extract_strided_slice %39 {offsets = [7, 0], sizes = [1, 32], strides = [1, 1]} : vector<9x32xf32> to vector<1x32xf32>
    %92 = vector.shape_cast %91 : vector<1x32xf32> to vector<32xf32>
    %93 = vector.shape_cast %92 : vector<32xf32> to vector<1x1x32xf32>
    %94 = vector.broadcast %93 : vector<1x1x32xf32> to vector<8x16x32xf32>
    %95 = arith.mulf %90, %94 : vector<8x16x32xf32>
    %96 = arith.addf %89, %95 : vector<8x16x32xf32>
    %c2_43 = arith.constant 2 : index
    %c2_44 = arith.constant 2 : index
    %c0_45 = arith.constant 0 : index
    %97 = vector.load %arg9[%c2_43, %c2_44, %c0_45] : memref<10x18x32xf32, #tpu.memory_space<vmem>>, vector<8x16x32xf32>
    %98 = vector.extract_strided_slice %39 {offsets = [8, 0], sizes = [1, 32], strides = [1, 1]} : vector<9x32xf32> to vector<1x32xf32>
    %99 = vector.shape_cast %98 : vector<1x32xf32> to vector<32xf32>
    %100 = vector.shape_cast %99 : vector<32xf32> to vector<1x1x32xf32>
    %101 = vector.broadcast %100 : vector<1x1x32xf32> to vector<8x16x32xf32>
    %102 = arith.mulf %97, %101 : vector<8x16x32xf32>
    %103 = arith.addf %96, %102 : vector<8x16x32xf32>
    %c0_46 = arith.constant 0 : index
    %c0_47 = arith.constant 0 : index
    %104 = vector.load %arg6[%c0_46, %c0_47] : memref<1x32xf32, #tpu.memory_space<vmem>>, vector<1x32xf32>
    %105 = vector.shape_cast %104 : vector<1x32xf32> to vector<32xf32>
    %106 = vector.shape_cast %105 : vector<32xf32> to vector<1x1x32xf32>
    %107 = vector.broadcast %106 : vector<1x1x32xf32> to vector<8x16x32xf32>
    %108 = arith.addf %103, %107 : vector<8x16x32xf32>
    %cst_48 = arith.constant 0.000000e+00 : f32
    %109 = vector.broadcast %cst_48 : f32 to vector<8x16x32xf32>
    %110 = arith.subf %109, %108 : vector<8x16x32xf32>
    %111 = math.exp %110 : vector<8x16x32xf32>
    %cst_49 = arith.constant 1.000000e+00 : f32
    %112 = vector.broadcast %cst_49 : f32 to vector<8x16x32xf32>
    %113 = arith.addf %112, %111 : vector<8x16x32xf32>
    %114 = tpu.reciprocal %113 {approx = true} : vector<8x16x32xf32> -> vector<8x16x32xf32>
    %115 = arith.mulf %108, %114 : vector<8x16x32xf32>
    %c0_50 = arith.constant 0 : index
    %c0_51 = arith.constant 0 : index
    %c0_52 = arith.constant 0 : index
    %c0_53 = arith.constant 0 : index
    %116 = vector.load %arg7[%c0_50, %c0_51, %c0_52, %c0_53] : memref<1x8x16x32xf32, #tpu.memory_space<vmem>>, vector<1x8x16x32xf32>
    %117 = vector.shape_cast %116 : vector<1x8x16x32xf32> to vector<8x16x32xf32>
    %118 = vector.shape_cast %115 : vector<8x16x32xf32> to vector<1x8x16x32xf32>
    tpu.vector_store %arg7[%c0_50, %c0_51, %c0_52, %c0_53], %118 {strides = array<i32>} : memref<1x8x16x32xf32, #tpu.memory_space<vmem>>, vector<1x8x16x32xf32>,
    %cst_54 = arith.constant dense<0.000000e+00> : vector<16x32xf32>
    %119 = vector.multi_reduction <add>, %115, %cst_54 [0] : vector<8x16x32xf32> to vector<16x32xf32>
    %cst_55 = arith.constant dense<0.000000e+00> : vector<32xf32>
    %120 = vector.multi_reduction <add>, %119, %cst_55 [0] : vector<16x32xf32> to vector<32xf32>
    %c0_i32 = arith.constant 0 : i32
    %121 = arith.cmpi eq, %arg1, %c0_i32 : i32
    %122 = arith.extui %121 : i1 to i32
    %c0_i32_56 = arith.constant 0 : i32
    %123 = arith.cmpi ne, %122, %c0_i32_56 : i32
    scf.if %123 {
      %cst_63 = arith.constant 0.000000e+00 : f32
      %128 = vector.broadcast %cst_63 : f32 to vector<1x1x32xf32>
      %c0_64 = arith.constant 0 : index
      %c0_65 = arith.constant 0 : index
      %c0_66 = arith.constant 0 : index
      %129 = vector.load %arg8[%c0_64, %c0_65, %c0_66] : memref<1x1x32xf32, #tpu.memory_space<vmem>>, vector<1x1x32xf32>
      tpu.vector_store %arg8[%c0_64, %c0_65, %c0_66], %128 {strides = array<i32>} : memref<1x1x32xf32, #tpu.memory_space<vmem>>, vector<1x1x32xf32>,
    } else {
    }
    %c0_57 = arith.constant 0 : index
    %c0_58 = arith.constant 0 : index
    %c0_59 = arith.constant 0 : index
    %124 = vector.load %arg8[%c0_57, %c0_58, %c0_59] : memref<1x1x32xf32, #tpu.memory_space<vmem>>, vector<1x1x32xf32>
    %125 = vector.shape_cast %120 : vector<32xf32> to vector<1x1x32xf32>
    %126 = arith.addf %124, %125 : vector<1x1x32xf32>
    %c0_60 = arith.constant 0 : index
    %c0_61 = arith.constant 0 : index
    %c0_62 = arith.constant 0 : index
    %127 = vector.load %arg8[%c0_60, %c0_61, %c0_62] : memref<1x1x32xf32, #tpu.memory_space<vmem>>, vector<1x1x32xf32>
    tpu.vector_store %arg8[%c0_60, %c0_61, %c0_62], %126 {strides = array<i32>} : memref<1x1x32xf32, #tpu.memory_space<vmem>>, vector<1x1x32xf32>,
    return
  }
  func.func @transform_0(%arg0: i32, %arg1: i32) -> (i32, i32, i32, i32) {
    %c0_i32 = arith.constant 0 : i32
    %c0_i32_0 = arith.constant 0 : i32
    %c0_i32_1 = arith.constant 0 : i32
    %c0_i32_2 = arith.constant 0 : i32
    return %arg0, %c0_i32, %c0_i32_0, %c0_i32_1 : i32, i32, i32, i32
  }
  func.func @transform_1(%arg0: i32, %arg1: i32) -> (i32, i32) {
    %c0_i32 = arith.constant 0 : i32
    %c0_i32_0 = arith.constant 0 : i32
    %c0_i32_1 = arith.constant 0 : i32
    return %c0_i32, %c0_i32_0 : i32, i32
  }
  func.func @transform_2(%arg0: i32, %arg1: i32) -> (i32, i32) {
    %c0_i32 = arith.constant 0 : i32
    %c0_i32_0 = arith.constant 0 : i32
    %c0_i32_1 = arith.constant 0 : i32
    return %c0_i32, %c0_i32_0 : i32, i32
  }
  func.func @transform_3(%arg0: i32, %arg1: i32) -> (i32, i32) {
    %c0_i32 = arith.constant 0 : i32
    %c0_i32_0 = arith.constant 0 : i32
    %c0_i32_1 = arith.constant 0 : i32
    return %c0_i32, %c0_i32_0 : i32, i32
  }
  func.func @transform_4(%arg0: i32, %arg1: i32) -> (i32, i32) {
    %c0_i32 = arith.constant 0 : i32
    %c0_i32_0 = arith.constant 0 : i32
    %c0_i32_1 = arith.constant 0 : i32
    return %c0_i32, %c0_i32_0 : i32, i32
  }
  func.func @transform_5(%arg0: i32, %arg1: i32) -> (i32, i32, i32, i32) {
    %c0_i32 = arith.constant 0 : i32
    %c0_i32_0 = arith.constant 0 : i32
    %c0_i32_1 = arith.constant 0 : i32
    return %arg0, %arg1, %c0_i32, %c0_i32_0 : i32, i32, i32, i32
  }
  func.func @transform_6(%arg0: i32, %arg1: i32) -> (i32, i32, i32) {
    %c0_i32 = arith.constant 0 : i32
    %c0_i32_0 = arith.constant 0 : i32
    %c0_i32_1 = arith.constant 0 : i32
    return %arg0, %c0_i32, %c0_i32_0 : i32, i32, i32
  }
}

</mosaic_0001>

<llo_original>
// kernel: tpu_custom_call.1
$region0: #{tpu_custom_call.1}
  #allocation0 [shape = 'u32[]', space=smem, size = 0x4, offset = 0x4, fixed_abs, tag = 'smem constant byte address 0x4 - core index']
  #allocation1 [shape = 'u32[144,128]{1,0:T(1,128)}', space=vmem, size = 0x12000, scoped, tag = 'internal scratch']
  #allocation2 [shape = 'f32[10,18,32]{2,1,0:T(8,128)}', space=vmem, size = 0x1e000, scoped, tag = 'scratch operand']
  %s0 = inlined_call_operand.vmem [shape: f32[2,18,16,8], index: 0, kind: input, shape index: {}]
  %s1 = inlined_call_operand.vmem [shape: bf16[8,32], index: 1, kind: input, shape index: {}]
  %s2 = inlined_call_operand.vmem [shape: f32[1,32], index: 2, kind: input, shape index: {}]
  %s3 = inlined_call_operand.vmem [shape: f32[9,32], index: 3, kind: input, shape index: {}]
  %s4 = inlined_call_operand.vmem [shape: f32[1,32], index: 4, kind: input, shape index: {}]
  %s5 = inlined_call_operand.hbm [shape: f32[2,16,16,32], index: 5, kind: output, shape index: {0}]
  %s6 = inlined_call_operand.hbm [shape: f32[2,1,32], index: 6, kind: output, shape index: {1}]
  %7 = xla_tuple %s5, %s6
  %s8 = sld [smem:[#allocation0]]
  $region65: #{tpu_custom_call.1} parent=0
    _
  %s10 = ssub.s32 1, %s8
  %s11 = scalar_select 0, %s10, %s8
  $region1: #{tpu_custom_call.1} parent=0
    #allocation3 [shape = 'u8[131072]{0}', space=vmem, size = 0x20000, scoped, tag = 'output window, operand 0']
    #allocation4 [shape = 's32[2]{0}', space=sflag, size = 0x8, scoped, tag = 'scoped memory for tpu_custom_call.1']
    #allocation5 [shape = 'u8[1024]{0}', space=vmem, size = 0x400, scoped, tag = 'output window, operand 1']
    #allocation6 [shape = 's32[2]{0}', space=sflag, size = 0x8, scoped, tag = 'scoped memory for tpu_custom_call.1']
    %12 = vsyncpa [#allocation4], 0
    %s13 = scalar_lea.sflag [#allocation4], 1
    %14 = vsyncpa %s13, 0
    %15 = vsyncpa [#allocation6], 0
    %s16 = scalar_lea.sflag [#allocation6], 1
    %17 = vsyncpa %s16, 0
    loop: start=0, step=1, limit=6
    $region2: #{tpu_custom_call.1} parent=1 // loop_pre_header
      _
    $region3: #{tpu_custom_call.1} parent=1 // loop_header
      %s19 = sphi 0, %s23
      %p20 = scmp.ge.s32.totalorder %s19, 6
      %s26 = sphi 0, %s38
      %s27 = sphi 0, %s34
      %s28 = sphi 0, %s26
      %s29 = sphi 0, %s27
      %s30 = sphi 0, %s28
      %s31 = sphi 0, %s29
      %s41 = sphi 0, %s43
      %s44 = sphi 0, %s41
      %s45 = sphi 0, %s44
      %s61 = sphi 0, %s45
      %s65 = sphi 0, %s65
      %s67 = sphi 0, %s65
      %s68 = sphi 0, %s67
      %s82 = sphi 0, %s68
      %s86 = sphi 0, %s86
      %s88 = sphi 0, %s86
      %s89 = sphi 0, %s88
      %s103 = sphi 0, %s89
      %s107 = sphi 0, %s107
      %s109 = sphi 0, %s107
      %s110 = sphi 0, %s109
      %s124 = sphi 0, %s110
      %s128 = sphi 0, %s128
      %s130 = sphi 0, %s128
      %s131 = sphi 0, %s130
      %s145 = sphi 0, %s131
      %s153 = sphi 0, %s155
      %s156 = sphi 0, %s153
      %s157 = sphi 0, %s156
      %s173 = sphi 0, %s157
      %s179 = sphi 0, %s181
      %s182 = sphi 0, %s179
      %s183 = sphi 0, %s182
      %s199 = sphi 0, %s183
    $region4: #{tpu_custom_call.1} parent=1 // loop_header_branch
      %22 = sbr.rel (%p20) target = $region8
    $region5: #{tpu_custom_call.1} parent=1 // loop_body
      %s24 = ssub.s32 %s19, 1
      %s25 = ssub.s32 %s19, 2
      %s32 = sadd.s32 1, %s27
      %p33 = scmp.ge.s32.totalorder %s32, 2
      %s34 = scalar_select %p33, 0, %s32
      %s35 = sadd.s32 1, %s26
      %s36 = scalar_select %p33, %s35, %s26
      %p37 = scmp.ge.s32.totalorder %s36, 2
      %s38 = scalar_select %p37, 0, %s36
      %s39 = ssub.s32 %s26, %s38
      %p40 = scmp.eq.s32.totalorder %s39, 0
      %s42 = sadd.s32 %s41, 1
      %s43 = scalar_select %p40, %s41, %s42
      %p46 = pneg %p40
      %p47 = scmp.eq.s32.totalorder %s19, 3
      %p48 = por %p46, %p47
      %p49 = scmp.ne.s32.totalorder %s41, %s44
      %p50 = scmp.eq.s32.totalorder %s19, 0
      %p51 = por %p49, %p50
      %p52 = scmp.ne.s32.totalorder %s41, %s44
      %p53 = scmp.eq.s32.totalorder %s24, 3
      %p54 = por %p52, %p53
      %p55 = scmp.ne.s32.totalorder %s44, %s45
      %p56 = scmp.eq.s32.totalorder %s24, 0
      %p57 = por %p55, %p56
      %p58 = scmp.ne.s32.totalorder %s44, %s45
      %p59 = scmp.eq.s32.totalorder %s25, 3
      %p60 = por %p58, %p59
      %p62 = scmp.ne.s32.totalorder %s45, %s61
      %p63 = scmp.eq.s32.totalorder %s25, 0
      %p64 = por %p62, %p63
      %s66 = sadd.s32 %s65, 1
      %p69 = scmp.eq.s32.totalorder %s19, 3
      %p70 = scmp.ne.s32.totalorder %s65, %s67
      %p71 = scmp.eq.s32.totalorder %s19, 0
      %p72 = por %p70, %p71
      %p73 = scmp.ne.s32.totalorder %s65, %s67
      %p74 = scmp.eq.s32.totalorder %s24, 3
      %p75 = por %p73, %p74
      %p76 = scmp.ne.s32.totalorder %s67, %s68
      %p77 = scmp.eq.s32.totalorder %s24, 0
      %p78 = por %p76, %p77
      %p79 = scmp.ne.s32.totalorder %s67, %s68
      %p80 = scmp.eq.s32.totalorder %s25, 3
      %p81 = por %p79, %p80
      %p83 = scmp.ne.s32.totalorder %s68, %s82
      %p84 = scmp.eq.s32.totalorder %s25, 0
      %p85 = por %p83, %p84
      %s87 = sadd.s32 %s86, 1
      %p90 = scmp.eq.s32.totalorder %s19, 3
      %p91 = scmp.ne.s32.totalorder %s86, %s88
      %p92 = scmp.eq.s32.totalorder %s19, 0
      %p93 = por %p91, %p92
      %p94 = scmp.ne.s32.totalorder %s86, %s88
      %p95 = scmp.eq.s32.totalorder %s24, 3
      %p96 = por %p94, %p95
      %p97 = scmp.ne.s32.totalorder %s88, %s89
      %p98 = scmp.eq.s32.totalorder %s24, 0
      %p99 = por %p97, %p98
      %p100 = scmp.ne.s32.totalorder %s88, %s89
      %p101 = scmp.eq.s32.totalorder %s25, 3
      %p102 = por %p100, %p101
      %p104 = scmp.ne.s32.totalorder %s89, %s103
      %p105 = scmp.eq.s32.totalorder %s25, 0
      %p106 = por %p104, %p105
      %s108 = sadd.s32 %s107, 1
      %p111 = scmp.eq.s32.totalorder %s19, 3
      %p112 = scmp.ne.s32.totalorder %s107, %s109
      %p113 = scmp.eq.s32.totalorder %s19, 0
      %p114 = por %p112, %p113
      %p115 = scmp.ne.s32.totalorder %s107, %s109
      %p116 = scmp.eq.s32.totalorder %s24, 3
      %p117 = por %p115, %p116
      %p118 = scmp.ne.s32.totalorder %s109, %s110
      %p119 = scmp.eq.s32.totalorder %s24, 0
      %p120 = por %p118, %p119
      %p121 = scmp.ne.s32.totalorder %s109, %s110
      %p122 = scmp.eq.s32.totalorder %s25, 3
      %p123 = por %p121, %p122
      %p125 = scmp.ne.s32.totalorder %s110, %s124
      %p126 = scmp.eq.s32.totalorder %s25, 0
      %p127 = por %p125, %p126
      %s129 = sadd.s32 %s128, 1
      %p132 = scmp.eq.s32.totalorder %s19, 3
      %p133 = scmp.ne.s32.totalorder %s128, %s130
      %p134 = scmp.eq.s32.totalorder %s19, 0
      %p135 = por %p133, %p134
      %p136 = scmp.ne.s32.totalorder %s128, %s130
      %p137 = scmp.eq.s32.totalorder %s24, 3
      %p138 = por %p136, %p137
      %p139 = scmp.ne.s32.totalorder %s130, %s131
      %p140 = scmp.eq.s32.totalorder %s24, 0
      %p141 = por %p139, %p140
      %p142 = scmp.ne.s32.totalorder %s130, %s131
      %p143 = scmp.eq.s32.totalorder %s25, 3
      %p144 = por %p142, %p143
      %p146 = scmp.ne.s32.totalorder %s131, %s145
      %p147 = scmp.eq.s32.totalorder %s25, 0
      %p148 = por %p146, %p147
      %s149 = ssub.s32 %s26, %s38
      %s150 = ssub.s32 %s27, %s34
      %s151 = sor.u32 %s149, %s150
      %p152 = scmp.eq.s32.totalorder %s151, 0
      %s154 = sadd.s32 %s153, 1
      %s155 = scalar_select %p152, %s153, %s154
      %p158 = pneg %p152
      %p159 = scmp.eq.s32.totalorder %s19, 3
      %p160 = por %p158, %p159
      %p161 = scmp.ne.s32.totalorder %s153, %s156
      %p162 = scmp.eq.s32.totalorder %s19, 0
      %p163 = por %p161, %p162
      %p164 = scmp.ne.s32.totalorder %s153, %s156
      %p165 = scmp.eq.s32.totalorder %s24, 3
      %p166 = por %p164, %p165
      %p167 = scmp.ne.s32.totalorder %s156, %s157
      %p168 = scmp.eq.s32.totalorder %s24, 0
      %p169 = por %p167, %p168
      %p170 = scmp.ne.s32.totalorder %s156, %s157
      %p171 = scmp.eq.s32.totalorder %s25, 3
      %p172 = por %p170, %p171
      %p174 = scmp.ne.s32.totalorder %s157, %s173
      %p175 = scmp.eq.s32.totalorder %s25, 0
      %p176 = por %p174, %p175
      %s177 = ssub.s32 %s26, %s38
      %p178 = scmp.eq.s32.totalorder %s177, 0
      %s180 = sadd.s32 %s179, 1
      %s181 = scalar_select %p178, %s179, %s180
      %p184 = pneg %p178
      %p185 = scmp.eq.s32.totalorder %s19, 3
      %p186 = por %p184, %p185
      %p187 = scmp.ne.s32.totalorder %s179, %s182
      %p188 = scmp.eq.s32.totalorder %s19, 0
      %p189 = por %p187, %p188
      %p190 = scmp.ne.s32.totalorder %s179, %s182
      %p191 = scmp.eq.s32.totalorder %s24, 3
      %p192 = por %p190, %p191
      %p193 = scmp.ne.s32.totalorder %s182, %s183
      %p194 = scmp.eq.s32.totalorder %s24, 0
      %p195 = por %p193, %p194
      %p196 = scmp.ne.s32.totalorder %s182, %s183
      %p197 = scmp.eq.s32.totalorder %s25, 3
      %p198 = por %p196, %p197
      %p200 = scmp.ne.s32.totalorder %s183, %s199
      %p201 = scmp.eq.s32.totalorder %s25, 0
      %p202 = por %p200, %p201
      %p203 = scmp.le.s32.totalorder 1, %s19
      %p204 = scmp.lt.s32.totalorder %s19, 5
      %p205 = pnand %p203, %p204
      %p206 = pneg %p205
      // Predicated region
      $region9: #{tpu_custom_call.1} parent=5 // pred_check
        _
      $region10: #{tpu_custom_call.1} parent=5 // pred_check_branch
        %208 = sbr.rel (%p205) target = $region12
      $region11: #{tpu_custom_call.1} parent=5 // pred_region
        %s209 = ssub.s32 %s19, 1
        // Predicated region
        $region13: #{tpu_custom_call.1} parent=11 // pred_check
          %p210 = pneg %p78
        $region14: #{tpu_custom_call.1} parent=11 // pred_check_branch
          %212 = sbr.rel (%p210) target = $region16
        $region15: #{tpu_custom_call.1} parent=11 // pred_region
          _
        $region16: #{tpu_custom_call.1} parent=11 // pred_fallthru
          _
        // Predicated region
        $region17: #{tpu_custom_call.1} parent=11 // pred_check
          %p213 = pneg %p99
        $region18: #{tpu_custom_call.1} parent=11 // pred_check_branch
          %215 = sbr.rel (%p213) target = $region20
        $region19: #{tpu_custom_call.1} parent=11 // pred_region
          _
        $region20: #{tpu_custom_call.1} parent=11 // pred_fallthru
          _
        // Predicated region
        $region21: #{tpu_custom_call.1} parent=11 // pred_check
          %p216 = pneg %p120
        $region22: #{tpu_custom_call.1} parent=11 // pred_check_branch
          %218 = sbr.rel (%p216) target = $region24
        $region23: #{tpu_custom_call.1} parent=11 // pred_region
          _
        $region24: #{tpu_custom_call.1} parent=11 // pred_fallthru
          _
        // Predicated region
        $region25: #{tpu_custom_call.1} parent=11 // pred_check
          %p219 = pneg %p141
        $region26: #{tpu_custom_call.1} parent=11 // pred_check_branch
          %221 = sbr.rel (%p219) target = $region28
        $region27: #{tpu_custom_call.1} parent=11 // pred_region
          _
        $region28: #{tpu_custom_call.1} parent=11 // pred_fallthru
          _
      $region12: #{tpu_custom_call.1} parent=5 // pred_fallthru
        _
      %p222 = scmp.lt.s32.totalorder %s19, 4
      // Predicated region
      $region29: #{tpu_custom_call.1} parent=5 // pred_check
        %p223 = pneg %p222
      $region30: #{tpu_custom_call.1} parent=5 // pred_check_branch
        %225 = sbr.rel (%p223) target = $region32
      $region31: #{tpu_custom_call.1} parent=5 // pred_region
        // Predicated region
        $region33: #{tpu_custom_call.1} parent=31 // pred_check
          %p226 = pneg %p51
        $region34: #{tpu_custom_call.1} parent=31 // pred_check_branch
          %228 = sbr.rel (%p226) target = $region36
        $region35: #{tpu_custom_call.1} parent=31 // pred_region
          %p229 = scmp.lt.s32.totalorder %s26, 1
          %s230 = scalar_select %p229, %s26, 1
          %s231 = smul.addr %s230, 36
          %s232 = smul.addr %s231, 8
          %s233 = scalar_lea.vmem %s0, %s232
        $region36: #{tpu_custom_call.1} parent=31 // pred_fallthru
          _
      $region32: #{tpu_custom_call.1} parent=5 // pred_fallthru
        _
      %p234 = scmp.le.s32.totalorder 1, %s19
      %p235 = scmp.lt.s32.totalorder %s19, 5
      %p236 = pnand %p234, %p235
      %p237 = pneg %p236
      // Predicated region
      $region37: #{tpu_custom_call.1} parent=5 // pred_check
        _
      $region38: #{tpu_custom_call.1} parent=5 // pred_check_branch
        %239 = sbr.rel (%p236) target = $region40
      $region39: #{tpu_custom_call.1} parent=5 // pred_region
        %s240 = ssub.s32 %s19, 1
        %p241 = scmp.lt.s32.totalorder %s28, 1
        %s242 = scalar_select %p241, %s28, 1
        %s243 = smul.addr %s242, 36
        %s244 = smul.addr %s243, 8
        %s245 = scalar_lea.vmem %s0, %s244
        %p246 = pneg %p57
        %p247 = pneg %p54
        %p248 = pneg %p78
        %p249 = pneg %p75
        %p250 = pneg %p99
        %p251 = pneg %p96
        %p252 = pneg %p120
        %p253 = pneg %p117
        %p254 = pneg %p141
        %p255 = pneg %p138
        %p256 = pneg %p169
        %p257 = pneg %p166
        %s258 = sand.u32 %s156, 1
        %s259 = scalar_lea.sflag [#allocation4], %s258
        %s260 = sand.u32 %s156, 1
        %s261 = smul.addr %s260, 128
        %s262 = scalar_lea.vmem [#allocation3], %s261
        %p263 = pneg %p195
        %p264 = pneg %p192
        %s265 = sand.u32 %s182, 1
        %s266 = scalar_lea.sflag [#allocation6], %s265
        %s267 = sand.u32 %s182, 1
        %s268 = scalar_lea.vmem [#allocation5], %s267
        %p269 = scmp.lt.s32.totalorder %s28, 1
        %s270 = scalar_select %p269, %s28, 1
        %s271 = smul.addr %s270, 36
        %s272 = smul.addr %s271, 8
        %s273 = scalar_lea.vmem %s0, %s272
        %s274 = smul.u32 8, %s29
        %s276 = smul.u32 %s29, 8
        %s277 = smul.u32 %s276, 16
        %s278 = scalar_lea.vmem %s273, %s277
        %v279 = vld [vmem:[%s278] sm:$0xff]
        %v280 = vld [vmem:[%s278 + $0x8] sm:$0xff]
        %v281 = vld [vmem:[%s278 + $0x10] sm:$0xff]
        %v282 = vld [vmem:[%s278 + $0x18] sm:$0xff]
        %v283 = vld [vmem:[%s278 + $0x20] sm:$0xff]
        %v284 = vld [vmem:[%s278 + $0x28] sm:$0xff]
        %v285 = vld [vmem:[%s278 + $0x30] sm:$0xff]
        %v286 = vld [vmem:[%s278 + $0x38] sm:$0xff]
        %v287 = vld [vmem:[%s278 + $0x40] sm:$0xff]
        %v288 = vld [vmem:[%s278 + $0x48] sm:$0xff]
        %v289 = vld [vmem:[%s278 + $0x50] sm:$0xff]
        %v290 = vld [vmem:[%s278 + $0x58] sm:$0xff]
        %v291 = vld [vmem:[%s278 + $0x60] sm:$0xff]
        %v292 = vld [vmem:[%s278 + $0x68] sm:$0xff]
        %v293 = vld [vmem:[%s278 + $0x70] sm:$0xff]
        %v294 = vld [vmem:[%s278 + $0x78] sm:$0xff]
        %v295 = vld [vmem:[%s278 + $0x80] sm:$0xff]
        %v296 = vld [vmem:[%s278 + $0x88] sm:$0xff]
        %v297 = vld [vmem:[%s278 + $0x90] sm:$0xff]
        %v298 = vld [vmem:[%s278 + $0x98] sm:$0xff]
        %v299 = vpack.c.bf16 %v280, %v279
        %v300 = vpack.c.bf16 %v282, %v281
        %v301 = vpack.c.bf16 %v284, %v283
        %v302 = vpack.c.bf16 %v286, %v285
        %v303 = vpack.c.bf16 %v288, %v287
        %v304 = vpack.c.bf16 %v290, %v289
        %v305 = vpack.c.bf16 %v292, %v291
        %v306 = vpack.c.bf16 %v294, %v293
        %v307 = vpack.c.bf16 %v296, %v295
        %v308 = vpack.c.bf16 %v298, %v297
        %v309 = vld [vmem:[%s1] sm:$0xf]
        %v310 = vld [vmem:[%s2] sm:$0x1]
        %v312 = vlaneseq
        %v313 = vshrl.u32 %v312, 7
        %v314 = vsub.s32 0, %v313
        %v315 = vrot.slane %v310, %v314
        %vm317 = vcmask 64512
        %v319 = vsel %vm317, %v299, 0
        %v322 = vsel %vm317, %v300, 0
        %v325 = vsel %vm317, %v301, 0
        %v328 = vsel %vm317, %v302, 0
        %v331 = vsel %vm317, %v303, 0
        %v334 = vsel %vm317, %v304, 0
        %v337 = vsel %vm317, %v305, 0
        %v340 = vsel %vm317, %v306, 0
        %v343 = vsel %vm317, %v307, 0
        %v346 = vsel %vm317, %v308, 0
        %vm348 = vcmask 1043456
        %v350 = vsel %vm348, %v309, 0
        %352 = vmatprep.subr.bf16.mxu0 0
        %353 = vmatpush1.bf16.msra.mxu0 %v350
        %354 = vmatprep.subr.bf16.mxu0 0
        %355 = vmatpush1.bf16.msra.mxu0 0
        %356 = vmatprep.subr.bf16.mxu0 0
        %357 = vmatpush1.bf16.msra.mxu0 0
        %358 = vmatprep.subr.bf16.mxu0 0
        %359 = vmatpush1.bf16.msra.mxu0 0
        %360 = vmatprep.subr.bf16.mxu0 0
        %361 = vmatpush1.bf16.msra.mxu0 0
        %362 = vmatprep.subr.bf16.mxu0 0
        %363 = vmatpush1.bf16.msra.mxu0 0
        %364 = vmatprep.subr.bf16.mxu0 0
        %365 = vmatpush1.bf16.msra.mxu0 0
        %366 = vmatprep.subr.bf16.mxu0 0
        %367 = vmatpush1.bf16.msra.mxu0 0
        %368 = vmatprep.subr.bf16.mxu0 0
        %369 = vmatpush1.bf16.msra.mxu0 0
        %370 = vmatprep.subr.bf16.mxu0 0
        %371 = vmatpush1.bf16.msra.mxu0 0
        %372 = vmatprep.subr.bf16.mxu0 0
        %373 = vmatpush1.bf16.msra.mxu0 0
        %374 = vmatprep.subr.bf16.mxu0 0
        %375 = vmatpush1.bf16.msra.mxu0 0
        %376 = vmatprep.subr.bf16.mxu0 0
        %377 = vmatpush1.bf16.msra.mxu0 0
        %378 = vmatprep.subr.bf16.mxu0 0
        %379 = vmatpush1.bf16.msra.mxu0 0
        %380 = vmatprep.subr.bf16.mxu0 0
        %381 = vmatpush1.bf16.msra.mxu0 0
        %382 = vmatprep.subr.bf16.mxu0 0
        %383 = vmatpush1.bf16.msra.mxu0 0
        %384 = vmatprep.mubr.bf16.mxu0 0
        %385 = vmatmul.mubr.bf16.gmra.mrb[0].mxu0 %v319
        %v386 = vpop.f32.mrb[0].mxu0
        %v387 = vadd.f32 %v315, %v386
        %v388 = vpop.f32.mrb[0].mxu0
        %v389 = vpop.f32.mrb[0].mxu0
        %v390 = vadd.f32 %v315, %v389
        %v391 = vpop.f32.mrb[0].mxu0
        %392 = vmatprep.mubr.bf16.mxu0 0
        %393 = vmatmul.mubr.bf16.gmra.mrb[0].mxu0 %v322
        %v394 = vpop.f32.mrb[0].mxu0
        %v395 = vadd.f32 %v315, %v394
        %v396 = vpop.f32.mrb[0].mxu0
        %v397 = vpop.f32.mrb[0].mxu0
        %v398 = vadd.f32 %v315, %v397
        %v399 = vpop.f32.mrb[0].mxu0
        %400 = vmatprep.mubr.bf16.mxu0 0
        %401 = vmatmul.mubr.bf16.gmra.mrb[0].mxu0 %v325
        %v402 = vpop.f32.mrb[0].mxu0
        %v403 = vadd.f32 %v315, %v402
        %v404 = vpop.f32.mrb[0].mxu0
        %v405 = vpop.f32.mrb[0].mxu0
        %v406 = vadd.f32 %v315, %v405
        %v407 = vpop.f32.mrb[0].mxu0
        %408 = vmatprep.mubr.bf16.mxu0 0
        %409 = vmatmul.mubr.bf16.gmra.mrb[0].mxu0 %v328
        %v410 = vpop.f32.mrb[0].mxu0
        %v411 = vadd.f32 %v315, %v410
        %v412 = vpop.f32.mrb[0].mxu0
        %v413 = vpop.f32.mrb[0].mxu0
        %v414 = vadd.f32 %v315, %v413
        %v415 = vpop.f32.mrb[0].mxu0
        %416 = vmatprep.mubr.bf16.mxu0 0
        %417 = vmatmul.mubr.bf16.gmra.mrb[0].mxu0 %v331
        %v418 = vpop.f32.mrb[0].mxu0
        %v419 = vadd.f32 %v315, %v418
        %v420 = vpop.f32.mrb[0].mxu0
        %v421 = vpop.f32.mrb[0].mxu0
        %v422 = vadd.f32 %v315, %v421
        %v423 = vpop.f32.mrb[0].mxu0
        %424 = vmatprep.mubr.bf16.mxu0 0
        %425 = vmatmul.mubr.bf16.gmra.mrb[0].mxu0 %v334
        %v426 = vpop.f32.mrb[0].mxu0
        %v427 = vadd.f32 %v315, %v426
        %v428 = vpop.f32.mrb[0].mxu0
        %v429 = vpop.f32.mrb[0].mxu0
        %v430 = vadd.f32 %v315, %v429
        %v431 = vpop.f32.mrb[0].mxu0
        %432 = vmatprep.mubr.bf16.mxu0 0
        %433 = vmatmul.mubr.bf16.gmra.mrb[0].mxu0 %v337
        %v434 = vpop.f32.mrb[0].mxu0
        %v435 = vadd.f32 %v315, %v434
        %v436 = vpop.f32.mrb[0].mxu0
        %v437 = vpop.f32.mrb[0].mxu0
        %v438 = vadd.f32 %v315, %v437
        %v439 = vpop.f32.mrb[0].mxu0
        %440 = vmatprep.mubr.bf16.mxu0 0
        %441 = vmatmul.mubr.bf16.gmra.mrb[0].mxu0 %v340
        %v442 = vpop.f32.mrb[0].mxu0
        %v443 = vadd.f32 %v315, %v442
        %v444 = vpop.f32.mrb[0].mxu0
        %v445 = vpop.f32.mrb[0].mxu0
        %v446 = vadd.f32 %v315, %v445
        %v447 = vpop.f32.mrb[0].mxu0
        %448 = vmatprep.mubr.bf16.mxu0 0
        %449 = vmatmul.mubr.bf16.gmra.mrb[0].mxu0 %v343
        %v450 = vpop.f32.mrb[0].mxu0
        %v451 = vadd.f32 %v315, %v450
        %v452 = vpop.f32.mrb[0].mxu0
        %v453 = vpop.f32.mrb[0].mxu0
        %v454 = vadd.f32 %v315, %v453
        %v455 = vpop.f32.mrb[0].mxu0
        %456 = vmatprep.mubr.bf16.mxu0 0
        %457 = vmatmul.mubr.bf16.gmra.mrb[0].mxu0 %v346
        %v458 = vpop.f32.mrb[0].mxu0
        %v459 = vadd.f32 %v315, %v458
        %v460 = vpop.f32.mrb[0].mxu0
        %v461 = vpop.f32.mrb[0].mxu0
        %v462 = vadd.f32 %v315, %v461
        %v463 = vpop.f32.mrb[0].mxu0
        %464 = vdwg.mxu0
        %v465 = vsub.f32 0.0, %v387
        %v466 = vsub.f32 0.0, %v390
        %v467 = vsub.f32 0.0, %v395
        %v468 = vsub.f32 0.0, %v398
        %v469 = vsub.f32 0.0, %v403
        %v470 = vsub.f32 0.0, %v406
        %v471 = vsub.f32 0.0, %v411
        %v472 = vsub.f32 0.0, %v414
        %v473 = vsub.f32 0.0, %v419
        %v474 = vsub.f32 0.0, %v422
        %v475 = vsub.f32 0.0, %v427
        %v476 = vsub.f32 0.0, %v430
        %v477 = vsub.f32 0.0, %v435
        %v478 = vsub.f32 0.0, %v438
        %v479 = vsub.f32 0.0, %v443
        %v480 = vsub.f32 0.0, %v446
        %v481 = vsub.f32 0.0, %v451
        %v482 = vsub.f32 0.0, %v454
        %v483 = vsub.f32 0.0, %v459
        %v484 = vsub.f32 0.0, %v462
        %v485 = vmul.f32 %v465, 1.442695
        %v486 = vpow.pop %v485
        %v487 = vmul.f32 %v466, 1.442695
        %v488 = vpow.pop %v487
        %v489 = vmul.f32 %v467, 1.442695
        %v490 = vpow.pop %v489
        %v491 = vmul.f32 %v468, 1.442695
        %v492 = vpow.pop %v491
        %v493 = vmul.f32 %v469, 1.442695
        %v494 = vpow.pop %v493
        %v495 = vmul.f32 %v470, 1.442695
        %v496 = vpow.pop %v495
        %v497 = vmul.f32 %v471, 1.442695
        %v498 = vpow.pop %v497
        %v499 = vmul.f32 %v472, 1.442695
        %v500 = vpow.pop %v499
        %v501 = vmul.f32 %v473, 1.442695
        %v502 = vpow.pop %v501
        %v503 = vmul.f32 %v474, 1.442695
        %v504 = vpow.pop %v503
        %v505 = vmul.f32 %v475, 1.442695
        %v506 = vpow.pop %v505
        %v507 = vmul.f32 %v476, 1.442695
        %v508 = vpow.pop %v507
        %v509 = vmul.f32 %v477, 1.442695
        %v510 = vpow.pop %v509
        %v511 = vmul.f32 %v478, 1.442695
        %v512 = vpow.pop %v511
        %v513 = vmul.f32 %v479, 1.442695
        %v514 = vpow.pop %v513
        %v515 = vmul.f32 %v480, 1.442695
        %v516 = vpow.pop %v515
        %v517 = vmul.f32 %v481, 1.442695
        %v518 = vpow.pop %v517
        %v519 = vmul.f32 %v482, 1.442695
        %v520 = vpow.pop %v519
        %v521 = vmul.f32 %v483, 1.442695
        %v522 = vpow.pop %v521
        %v523 = vmul.f32 %v484, 1.442695
        %v524 = vpow.pop %v523
        %v525 = vadd.f32 %v486, 1.0
        %v526 = vadd.f32 %v488, 1.0
        %v527 = vadd.f32 %v490, 1.0
        %v528 = vadd.f32 %v492, 1.0
        %v529 = vadd.f32 %v494, 1.0
        %v530 = vadd.f32 %v496, 1.0
        %v531 = vadd.f32 %v498, 1.0
        %v532 = vadd.f32 %v500, 1.0
        %v533 = vadd.f32 %v502, 1.0
        %v534 = vadd.f32 %v504, 1.0
        %v535 = vadd.f32 %v506, 1.0
        %v536 = vadd.f32 %v508, 1.0
        %v537 = vadd.f32 %v510, 1.0
        %v538 = vadd.f32 %v512, 1.0
        %v539 = vadd.f32 %v514, 1.0
        %v540 = vadd.f32 %v516, 1.0
        %v541 = vadd.f32 %v518, 1.0
        %v542 = vadd.f32 %v520, 1.0
        %v543 = vadd.f32 %v522, 1.0
        %v544 = vadd.f32 %v524, 1.0
        %v545 = vrcp.pop %v525
        %v546 = vrcp.pop %v526
        %v547 = vrcp.pop %v527
        %v548 = vrcp.pop %v528
        %v549 = vrcp.pop %v529
        %v550 = vrcp.pop %v530
        %v551 = vrcp.pop %v531
        %v552 = vrcp.pop %v532
        %v553 = vrcp.pop %v533
        %v554 = vrcp.pop %v534
        %v555 = vrcp.pop %v535
        %v556 = vrcp.pop %v536
        %v557 = vrcp.pop %v537
        %v558 = vrcp.pop %v538
        %v559 = vrcp.pop %v539
        %v560 = vrcp.pop %v540
        %v561 = vrcp.pop %v541
        %v562 = vrcp.pop %v542
        %v563 = vrcp.pop %v543
        %v564 = vrcp.pop %v544
        %v565 = vmul.f32 %v387, %v545
        %v566 = vmul.f32 %v390, %v546
        %v567 = vmul.f32 %v395, %v547
        %v568 = vmul.f32 %v398, %v548
        %v569 = vmul.f32 %v403, %v549
        %v570 = vmul.f32 %v406, %v550
        %v571 = vmul.f32 %v411, %v551
        %v572 = vmul.f32 %v414, %v552
        %v573 = vmul.f32 %v419, %v553
        %v574 = vmul.f32 %v422, %v554
        %v575 = vmul.f32 %v427, %v555
        %v576 = vmul.f32 %v430, %v556
        %v577 = vmul.f32 %v435, %v557
        %v578 = vmul.f32 %v438, %v558
        %v579 = vmul.f32 %v443, %v559
        %v580 = vmul.f32 %v446, %v560
        %v581 = vmul.f32 %v451, %v561
        %v582 = vmul.f32 %v454, %v562
        %v583 = vmul.f32 %v459, %v563
        %v584 = vmul.f32 %v462, %v564
        %v585 = vstv %s276
        %v586 = vadd.s32 %v585, 1
        %v587 = vadd.s32 %v585, 2
        %v588 = vadd.s32 %v585, 3
        %v589 = vadd.s32 %v585, 4
        %v590 = vadd.s32 %v585, 5
        %v591 = vadd.s32 %v585, 6
        %v592 = vadd.s32 %v585, 7
        %v593 = vadd.s32 %v585, 8
        %v594 = vadd.s32 %v585, 9
        %vm595 = vcmp.ge.s32.totalorder %v585, 1
        %vm596 = vcmp.ge.s32.totalorder %v586, 1
        %vm597 = vcmp.ge.s32.totalorder %v587, 1
        %vm598 = vcmp.ge.s32.totalorder %v588, 1
        %vm599 = vcmp.ge.s32.totalorder %v589, 1
        %vm600 = vcmp.ge.s32.totalorder %v590, 1
        %vm601 = vcmp.ge.s32.totalorder %v591, 1
        %vm602 = vcmp.ge.s32.totalorder %v592, 1
        %vm603 = vcmp.ge.s32.totalorder %v593, 1
        %vm604 = vcmp.ge.s32.totalorder %v594, 1
        %vm605 = vcmp.lt.s32.totalorder %v585, 17
        %vm606 = vcmp.lt.s32.totalorder %v586, 17
        %vm607 = vcmp.lt.s32.totalorder %v587, 17
        %vm608 = vcmp.lt.s32.totalorder %v588, 17
        %vm609 = vcmp.lt.s32.totalorder %v589, 17
        %vm610 = vcmp.lt.s32.totalorder %v590, 17
        %vm611 = vcmp.lt.s32.totalorder %v591, 17
        %vm612 = vcmp.lt.s32.totalorder %v592, 17
        %vm613 = vcmp.lt.s32.totalorder %v593, 17
        %vm614 = vcmp.lt.s32.totalorder %v594, 17
        %vm615 = vmand %vm595, %vm605
        %vm616 = vmand %vm596, %vm606
        %vm617 = vmand %vm597, %vm607
        %vm618 = vmand %vm598, %vm608
        %vm619 = vmand %vm599, %vm609
        %vm620 = vmand %vm600, %vm610
        %vm621 = vmand %vm601, %vm611
        %vm622 = vmand %vm602, %vm612
        %vm623 = vmand %vm603, %vm613
        %vm624 = vmand %vm604, %vm614
        %v625 = vsel %vm615, 1, 0
        %v626 = vsel %vm616, 1, 0
        %v627 = vsel %vm617, 1, 0
        %v628 = vsel %vm618, 1, 0
        %v629 = vsel %vm619, 1, 0
        %v630 = vsel %vm620, 1, 0
        %v631 = vsel %vm621, 1, 0
        %v632 = vsel %vm622, 1, 0
        %v633 = vsel %vm623, 1, 0
        %v634 = vsel %vm624, 1, 0
        %v635 = vcvt.s32.f32 %v625
        %v636 = vcvt.s32.f32 %v626
        %v637 = vcvt.s32.f32 %v627
        %v638 = vcvt.s32.f32 %v628
        %v639 = vcvt.s32.f32 %v629
        %v640 = vcvt.s32.f32 %v630
        %v641 = vcvt.s32.f32 %v631
        %v642 = vcvt.s32.f32 %v632
        %v643 = vcvt.s32.f32 %v633
        %v644 = vcvt.s32.f32 %v634
        %v645 = vmul.f32 %v565, %v635
        %v646 = vmul.f32 %v566, %v635
        %v647 = vmul.f32 %v567, %v636
        %v648 = vmul.f32 %v568, %v636
        %v649 = vmul.f32 %v569, %v637
        %v650 = vmul.f32 %v570, %v637
        %v651 = vmul.f32 %v571, %v638
        %v652 = vmul.f32 %v572, %v638
        %v653 = vmul.f32 %v573, %v639
        %v654 = vmul.f32 %v574, %v639
        %v655 = vmul.f32 %v575, %v640
        %v656 = vmul.f32 %v576, %v640
        %v657 = vmul.f32 %v577, %v641
        %v658 = vmul.f32 %v578, %v641
        %v659 = vmul.f32 %v579, %v642
        %v660 = vmul.f32 %v580, %v642
        %v661 = vmul.f32 %v581, %v643
        %v662 = vmul.f32 %v582, %v643
        %v663 = vmul.f32 %v583, %v644
        %v664 = vmul.f32 %v584, %v644
        %vm665 = vcmask 253952
        %666 = vst.msk [vmem:[#allocation2] sm:$0x1] %vm665, 0.0
        %667 = vst.msk [vmem:[#allocation2 + $0x18] sm:$0x1] %vm665, 0.0
        %668 = vst.msk [vmem:[#allocation2 + $0x30] sm:$0x1] %vm665, 0.0
        %669 = vst.msk [vmem:[#allocation2 + $0x48] sm:$0x1] %vm665, 0.0
        %670 = vst.msk [vmem:[#allocation2 + $0x60] sm:$0x1] %vm665, 0.0
        %671 = vst.msk [vmem:[#allocation2 + $0x78] sm:$0x1] %vm665, 0.0
        %672 = vst.msk [vmem:[#allocation2 + $0x90] sm:$0x1] %vm665, 0.0
        %673 = vst.msk [vmem:[#allocation2 + $0xa8] sm:$0x1] %vm665, 0.0
        %674 = vst.msk [vmem:[#allocation2 + $0xc0] sm:$0x1] %vm665, 0.0
        %675 = vst.msk [vmem:[#allocation2 + $0xd8] sm:$0x1] %vm665, 0.0
        %676 = vst.msk [vmem:[#allocation2 + $0x11] sm:$0x1] %vm665, 0.0
        %677 = vst.msk [vmem:[#allocation2 + $0x29] sm:$0x1] %vm665, 0.0
        %678 = vst.msk [vmem:[#allocation2 + $0x41] sm:$0x1] %vm665, 0.0
        %679 = vst.msk [vmem:[#allocation2 + $0x59] sm:$0x1] %vm665, 0.0
        %680 = vst.msk [vmem:[#allocation2 + $0x71] sm:$0x1] %vm665, 0.0
        %681 = vst.msk [vmem:[#allocation2 + $0x89] sm:$0x1] %vm665, 0.0
        %682 = vst.msk [vmem:[#allocation2 + $0xa1] sm:$0x1] %vm665, 0.0
        %683 = vst.msk [vmem:[#allocation2 + $0xb9] sm:$0x1] %vm665, 0.0
        %684 = vst.msk [vmem:[#allocation2 + $0xd1] sm:$0x1] %vm665, 0.0
        %685 = vst.msk [vmem:[#allocation2 + $0xe9] sm:$0x1] %vm665, 0.0
        %vm686 = vcmask 261120
        %687 = vst.msk [vmem:[#allocation2 + $0x1] sm:$0xff] %vm686, %v645
        %688 = vst.msk [vmem:[#allocation2 + $0x9] sm:$0xff] %vm686, %v646
        %689 = vst.msk [vmem:[#allocation2 + $0x19] sm:$0xff] %vm686, %v647
        %690 = vst.msk [vmem:[#allocation2 + $0x21] sm:$0xff] %vm686, %v648
        %691 = vst.msk [vmem:[#allocation2 + $0x31] sm:$0xff] %vm686, %v649
        %692 = vst.msk [vmem:[#allocation2 + $0x39] sm:$0xff] %vm686, %v650
        %693 = vst.msk [vmem:[#allocation2 + $0x49] sm:$0xff] %vm686, %v651
        %694 = vst.msk [vmem:[#allocation2 + $0x51] sm:$0xff] %vm686, %v652
        %695 = vst.msk [vmem:[#allocation2 + $0x61] sm:$0xff] %vm686, %v653
        %696 = vst.msk [vmem:[#allocation2 + $0x69] sm:$0xff] %vm686, %v654
        %697 = vst.msk [vmem:[#allocation2 + $0x79] sm:$0xff] %vm686, %v655
        %698 = vst.msk [vmem:[#allocation2 + $0x81] sm:$0xff] %vm686, %v656
        %699 = vst.msk [vmem:[#allocation2 + $0x91] sm:$0xff] %vm686, %v657
        %700 = vst.msk [vmem:[#allocation2 + $0x99] sm:$0xff] %vm686, %v658
        %701 = vst.msk [vmem:[#allocation2 + $0xa9] sm:$0xff] %vm686, %v659
        %702 = vst.msk [vmem:[#allocation2 + $0xb1] sm:$0xff] %vm686, %v660
        %703 = vst.msk [vmem:[#allocation2 + $0xc1] sm:$0xff] %vm686, %v661
        %704 = vst.msk [vmem:[#allocation2 + $0xc9] sm:$0xff] %vm686, %v662
        %705 = vst.msk [vmem:[#allocation2 + $0xd9] sm:$0xff] %vm686, %v663
        %706 = vst.msk [vmem:[#allocation2 + $0xe1] sm:$0xff] %vm686, %v664
        %v707 = vld [vmem:[%s3] sm:$0xff]
        %v708 = vld [vmem:[%s3 + $0x8] sm:$0x1]
        %v709 = vld [vmem:[#allocation2] sm:$0xff]
        %v710 = vld [vmem:[#allocation2 + $0x8] sm:$0xff]
        %v711 = vld [vmem:[#allocation2 + $0x18] sm:$0xff]
        %v712 = vld [vmem:[#allocation2 + $0x20] sm:$0xff]
        %v713 = vld [vmem:[#allocation2 + $0x30] sm:$0xff]
        %v714 = vld [vmem:[#allocation2 + $0x38] sm:$0xff]
        %v715 = vld [vmem:[#allocation2 + $0x48] sm:$0xff]
        %v716 = vld [vmem:[#allocation2 + $0x50] sm:$0xff]
        %v717 = vld [vmem:[#allocation2 + $0x60] sm:$0xff]
        %v718 = vld [vmem:[#allocation2 + $0x68] sm:$0xff]
        %v719 = vld [vmem:[#allocation2 + $0x78] sm:$0xff]
        %v720 = vld [vmem:[#allocation2 + $0x80] sm:$0xff]
        %v721 = vld [vmem:[#allocation2 + $0x90] sm:$0xff]
        %v722 = vld [vmem:[#allocation2 + $0x98] sm:$0xff]
        %v723 = vld [vmem:[#allocation2 + $0xa8] sm:$0xff]
        %v724 = vld [vmem:[#allocation2 + $0xb0] sm:$0xff]
        %v725 = vlaneseq
        %v726 = vshrl.u32 %v725, 7
        %v727 = vsub.s32 0, %v726
        %v728 = vrot.slane %v707, %v727
        %v729 = vmul.f32 %v709, %v728
        %v730 = vmul.f32 %v710, %v728
        %v731 = vmul.f32 %v711, %v728
        %v732 = vmul.f32 %v712, %v728
        %v733 = vmul.f32 %v713, %v728
        %v734 = vmul.f32 %v714, %v728
        %v735 = vmul.f32 %v715, %v728
        %v736 = vmul.f32 %v716, %v728
        %v737 = vmul.f32 %v717, %v728
        %v738 = vmul.f32 %v718, %v728
        %v739 = vmul.f32 %v719, %v728
        %v740 = vmul.f32 %v720, %v728
        %v741 = vmul.f32 %v721, %v728
        %v742 = vmul.f32 %v722, %v728
        %v743 = vmul.f32 %v723, %v728
        %v744 = vmul.f32 %v724, %v728
        %v745 = vadd.f32 %v729, 0.0
        %v746 = vadd.f32 %v730, 0.0
        %v747 = vadd.f32 %v731, 0.0
        %v748 = vadd.f32 %v732, 0.0
        %v749 = vadd.f32 %v733, 0.0
        %v750 = vadd.f32 %v734, 0.0
        %v751 = vadd.f32 %v735, 0.0
        %v752 = vadd.f32 %v736, 0.0
        %v753 = vadd.f32 %v737, 0.0
        %v754 = vadd.f32 %v738, 0.0
        %v755 = vadd.f32 %v739, 0.0
        %v756 = vadd.f32 %v740, 0.0
        %v757 = vadd.f32 %v741, 0.0
        %v758 = vadd.f32 %v742, 0.0
        %v759 = vadd.f32 %v743, 0.0
        %v760 = vadd.f32 %v744, 0.0
        %v761 = vld [vmem:[#allocation2 + $0x1] sm:$0xff]
        %v762 = vld [vmem:[#allocation2 + $0x9] sm:$0xff]
        %v763 = vld [vmem:[#allocation2 + $0x19] sm:$0xff]
        %v764 = vld [vmem:[#allocation2 + $0x21] sm:$0xff]
        %v765 = vld [vmem:[#allocation2 + $0x31] sm:$0xff]
        %v766 = vld [vmem:[#allocation2 + $0x39] sm:$0xff]
        %v767 = vld [vmem:[#allocation2 + $0x49] sm:$0xff]
        %v768 = vld [vmem:[#allocation2 + $0x51] sm:$0xff]
        %v769 = vld [vmem:[#allocation2 + $0x61] sm:$0xff]
        %v770 = vld [vmem:[#allocation2 + $0x69] sm:$0xff]
        %v771 = vld [vmem:[#allocation2 + $0x79] sm:$0xff]
        %v772 = vld [vmem:[#allocation2 + $0x81] sm:$0xff]
        %v773 = vld [vmem:[#allocation2 + $0x91] sm:$0xff]
        %v774 = vld [vmem:[#allocation2 + $0x99] sm:$0xff]
        %v775 = vld [vmem:[#allocation2 + $0xa9] sm:$0xff]
        %v776 = vld [vmem:[#allocation2 + $0xb1] sm:$0xff]
        %v777 = vlaneseq
        %v778 = vshrl.u32 %v777, 7
        %v779 = vsub.s32 1, %v778
        %v780 = vrot.slane %v707, %v779
        %v781 = vmul.f32 %v761, %v780
        %v782 = vmul.f32 %v762, %v780
        %v783 = vmul.f32 %v763, %v780
        %v784 = vmul.f32 %v764, %v780
        %v785 = vmul.f32 %v765, %v780
        %v786 = vmul.f32 %v766, %v780
        %v787 = vmul.f32 %v767, %v780
        %v788 = vmul.f32 %v768, %v780
        %v789 = vmul.f32 %v769, %v780
        %v790 = vmul.f32 %v770, %v780
        %v791 = vmul.f32 %v771, %v780
        %v792 = vmul.f32 %v772, %v780
        %v793 = vmul.f32 %v773, %v780
        %v794 = vmul.f32 %v774, %v780
        %v795 = vmul.f32 %v775, %v780
        %v796 = vmul.f32 %v776, %v780
        %v797 = vadd.f32 %v745, %v781
        %v798 = vadd.f32 %v746, %v782
        %v799 = vadd.f32 %v747, %v783
        %v800 = vadd.f32 %v748, %v784
        %v801 = vadd.f32 %v749, %v785
        %v802 = vadd.f32 %v750, %v786
        %v803 = vadd.f32 %v751, %v787
        %v804 = vadd.f32 %v752, %v788
        %v805 = vadd.f32 %v753, %v789
        %v806 = vadd.f32 %v754, %v790
        %v807 = vadd.f32 %v755, %v791
        %v808 = vadd.f32 %v756, %v792
        %v809 = vadd.f32 %v757, %v793
        %v810 = vadd.f32 %v758, %v794
        %v811 = vadd.f32 %v759, %v795
        %v812 = vadd.f32 %v760, %v796
        %v813 = vld [vmem:[#allocation2 + $0x2] sm:$0xff]
        %v814 = vld [vmem:[#allocation2 + $0xa] sm:$0xff]
        %v815 = vld [vmem:[#allocation2 + $0x1a] sm:$0xff]
        %v816 = vld [vmem:[#allocation2 + $0x22] sm:$0xff]
        %v817 = vld [vmem:[#allocation2 + $0x32] sm:$0xff]
        %v818 = vld [vmem:[#allocation2 + $0x3a] sm:$0xff]
        %v819 = vld [vmem:[#allocation2 + $0x4a] sm:$0xff]
        %v820 = vld [vmem:[#allocation2 + $0x52] sm:$0xff]
        %v821 = vld [vmem:[#allocation2 + $0x62] sm:$0xff]
        %v822 = vld [vmem:[#allocation2 + $0x6a] sm:$0xff]
        %v823 = vld [vmem:[#allocation2 + $0x7a] sm:$0xff]
        %v824 = vld [vmem:[#allocation2 + $0x82] sm:$0xff]
        %v825 = vld [vmem:[#allocation2 + $0x92] sm:$0xff]
        %v826 = vld [vmem:[#allocation2 + $0x9a] sm:$0xff]
        %v827 = vld [vmem:[#allocation2 + $0xaa] sm:$0xff]
        %v828 = vld [vmem:[#allocation2 + $0xb2] sm:$0xff]
        %v829 = vlaneseq
        %v830 = vshrl.u32 %v829, 7
        %v831 = vsub.s32 2, %v830
        %v832 = vrot.slane %v707, %v831
        %v833 = vmul.f32 %v813, %v832
        %v834 = vmul.f32 %v814, %v832
        %v835 = vmul.f32 %v815, %v832
        %v836 = vmul.f32 %v816, %v832
        %v837 = vmul.f32 %v817, %v832
        %v838 = vmul.f32 %v818, %v832
        %v839 = vmul.f32 %v819, %v832
        %v840 = vmul.f32 %v820, %v832
        %v841 = vmul.f32 %v821, %v832
        %v842 = vmul.f32 %v822, %v832
        %v843 = vmul.f32 %v823, %v832
        %v844 = vmul.f32 %v824, %v832
        %v845 = vmul.f32 %v825, %v832
        %v846 = vmul.f32 %v826, %v832
        %v847 = vmul.f32 %v827, %v832
        %v848 = vmul.f32 %v828, %v832
        %v849 = vadd.f32 %v797, %v833
        %v850 = vadd.f32 %v798, %v834
        %v851 = vadd.f32 %v799, %v835
        %v852 = vadd.f32 %v800, %v836
        %v853 = vadd.f32 %v801, %v837
        %v854 = vadd.f32 %v802, %v838
        %v855 = vadd.f32 %v803, %v839
        %v856 = vadd.f32 %v804, %v840
        %v857 = vadd.f32 %v805, %v841
        %v858 = vadd.f32 %v806, %v842
        %v859 = vadd.f32 %v807, %v843
        %v860 = vadd.f32 %v808, %v844
        %v861 = vadd.f32 %v809, %v845
        %v862 = vadd.f32 %v810, %v846
        %v863 = vadd.f32 %v811, %v847
        %v864 = vadd.f32 %v812, %v848
        %s865 = scalar_lea.vmem [#allocation2], 24
        %v866 = vld [vmem:[%s865] sm:$0xff]
        %v867 = vld [vmem:[%s865 + $0x8] sm:$0xff]
        %v868 = vld [vmem:[%s865 + $0x18] sm:$0xff]
        %v869 = vld [vmem:[%s865 + $0x20] sm:$0xff]
        %v870 = vld [vmem:[%s865 + $0x30] sm:$0xff]
        %v871 = vld [vmem:[%s865 + $0x38] sm:$0xff]
        %v872 = vld [vmem:[%s865 + $0x48] sm:$0xff]
        %v873 = vld [vmem:[%s865 + $0x50] sm:$0xff]
        %v874 = vld [vmem:[%s865 + $0x60] sm:$0xff]
        %v875 = vld [vmem:[%s865 + $0x68] sm:$0xff]
        %v876 = vld [vmem:[%s865 + $0x78] sm:$0xff]
        %v877 = vld [vmem:[%s865 + $0x80] sm:$0xff]
        %v878 = vld [vmem:[%s865 + $0x90] sm:$0xff]
        %v879 = vld [vmem:[%s865 + $0x98] sm:$0xff]
        %v880 = vld [vmem:[%s865 + $0xa8] sm:$0xff]
        %v881 = vld [vmem:[%s865 + $0xb0] sm:$0xff]
        %v882 = vlaneseq
        %v883 = vshrl.u32 %v882, 7
        %v884 = vsub.s32 3, %v883
        %v885 = vrot.slane %v707, %v884
        %v886 = vmul.f32 %v866, %v885
        %v887 = vmul.f32 %v867, %v885
        %v888 = vmul.f32 %v868, %v885
        %v889 = vmul.f32 %v869, %v885
        %v890 = vmul.f32 %v870, %v885
        %v891 = vmul.f32 %v871, %v885
        %v892 = vmul.f32 %v872, %v885
        %v893 = vmul.f32 %v873, %v885
        %v894 = vmul.f32 %v874, %v885
        %v895 = vmul.f32 %v875, %v885
        %v896 = vmul.f32 %v876, %v885
        %v897 = vmul.f32 %v877, %v885
        %v898 = vmul.f32 %v878, %v885
        %v899 = vmul.f32 %v879, %v885
        %v900 = vmul.f32 %v880, %v885
        %v901 = vmul.f32 %v881, %v885
        %v902 = vadd.f32 %v849, %v886
        %v903 = vadd.f32 %v850, %v887
        %v904 = vadd.f32 %v851, %v888
        %v905 = vadd.f32 %v852, %v889
        %v906 = vadd.f32 %v853, %v890
        %v907 = vadd.f32 %v854, %v891
        %v908 = vadd.f32 %v855, %v892
        %v909 = vadd.f32 %v856, %v893
        %v910 = vadd.f32 %v857, %v894
        %v911 = vadd.f32 %v858, %v895
        %v912 = vadd.f32 %v859, %v896
        %v913 = vadd.f32 %v860, %v897
        %v914 = vadd.f32 %v861, %v898
        %v915 = vadd.f32 %v862, %v899
        %v916 = vadd.f32 %v863, %v900
        %v917 = vadd.f32 %v864, %v901
        %v918 = vld [vmem:[%s865 + $0x1] sm:$0xff]
        %v919 = vld [vmem:[%s865 + $0x9] sm:$0xff]
        %v920 = vld [vmem:[%s865 + $0x19] sm:$0xff]
        %v921 = vld [vmem:[%s865 + $0x21] sm:$0xff]
        %v922 = vld [vmem:[%s865 + $0x31] sm:$0xff]
        %v923 = vld [vmem:[%s865 + $0x39] sm:$0xff]
        %v924 = vld [vmem:[%s865 + $0x49] sm:$0xff]
        %v925 = vld [vmem:[%s865 + $0x51] sm:$0xff]
        %v926 = vld [vmem:[%s865 + $0x61] sm:$0xff]
        %v927 = vld [vmem:[%s865 + $0x69] sm:$0xff]
        %v928 = vld [vmem:[%s865 + $0x79] sm:$0xff]
        %v929 = vld [vmem:[%s865 + $0x81] sm:$0xff]
        %v930 = vld [vmem:[%s865 + $0x91] sm:$0xff]
        %v931 = vld [vmem:[%s865 + $0x99] sm:$0xff]
        %v932 = vld [vmem:[%s865 + $0xa9] sm:$0xff]
        %v933 = vld [vmem:[%s865 + $0xb1] sm:$0xff]
        %v934 = vlaneseq
        %v935 = vshrl.u32 %v934, 7
        %v936 = vsub.s32 4, %v935
        %v937 = vrot.slane %v707, %v936
        %v938 = vmul.f32 %v918, %v937
        %v939 = vmul.f32 %v919, %v937
        %v940 = vmul.f32 %v920, %v937
        %v941 = vmul.f32 %v921, %v937
        %v942 = vmul.f32 %v922, %v937
        %v943 = vmul.f32 %v923, %v937
        %v944 = vmul.f32 %v924, %v937
        %v945 = vmul.f32 %v925, %v937
        %v946 = vmul.f32 %v926, %v937
        %v947 = vmul.f32 %v927, %v937
        %v948 = vmul.f32 %v928, %v937
        %v949 = vmul.f32 %v929, %v937
        %v950 = vmul.f32 %v930, %v937
        %v951 = vmul.f32 %v931, %v937
        %v952 = vmul.f32 %v932, %v937
        %v953 = vmul.f32 %v933, %v937
        %v954 = vadd.f32 %v902, %v938
        %v955 = vadd.f32 %v903, %v939
        %v956 = vadd.f32 %v904, %v940
        %v957 = vadd.f32 %v905, %v941
        %v958 = vadd.f32 %v906, %v942
        %v959 = vadd.f32 %v907, %v943
        %v960 = vadd.f32 %v908, %v944
        %v961 = vadd.f32 %v909, %v945
        %v962 = vadd.f32 %v910, %v946
        %v963 = vadd.f32 %v911, %v947
        %v964 = vadd.f32 %v912, %v948
        %v965 = vadd.f32 %v913, %v949
        %v966 = vadd.f32 %v914, %v950
        %v967 = vadd.f32 %v915, %v951
        %v968 = vadd.f32 %v916, %v952
        %v969 = vadd.f32 %v917, %v953
        %v970 = vld [vmem:[%s865 + $0x2] sm:$0xff]
        %v971 = vld [vmem:[%s865 + $0xa] sm:$0xff]
        %v972 = vld [vmem:[%s865 + $0x1a] sm:$0xff]
        %v973 = vld [vmem:[%s865 + $0x22] sm:$0xff]
        %v974 = vld [vmem:[%s865 + $0x32] sm:$0xff]
        %v975 = vld [vmem:[%s865 + $0x3a] sm:$0xff]
        %v976 = vld [vmem:[%s865 + $0x4a] sm:$0xff]
        %v977 = vld [vmem:[%s865 + $0x52] sm:$0xff]
        %v978 = vld [vmem:[%s865 + $0x62] sm:$0xff]
        %v979 = vld [vmem:[%s865 + $0x6a] sm:$0xff]
        %v980 = vld [vmem:[%s865 + $0x7a] sm:$0xff]
        %v981 = vld [vmem:[%s865 + $0x82] sm:$0xff]
        %v982 = vld [vmem:[%s865 + $0x92] sm:$0xff]
        %v983 = vld [vmem:[%s865 + $0x9a] sm:$0xff]
        %v984 = vld [vmem:[%s865 + $0xaa] sm:$0xff]
        %v985 = vld [vmem:[%s865 + $0xb2] sm:$0xff]
        %v986 = vlaneseq
        %v987 = vshrl.u32 %v986, 7
        %v988 = vsub.s32 5, %v987
        %v989 = vrot.slane %v707, %v988
        %v990 = vmul.f32 %v970, %v989
        %v991 = vmul.f32 %v971, %v989
        %v992 = vmul.f32 %v972, %v989
        %v993 = vmul.f32 %v973, %v989
        %v994 = vmul.f32 %v974, %v989
        %v995 = vmul.f32 %v975, %v989
        %v996 = vmul.f32 %v976, %v989
        %v997 = vmul.f32 %v977, %v989
        %v998 = vmul.f32 %v978, %v989
        %v999 = vmul.f32 %v979, %v989
        %v1000 = vmul.f32 %v980, %v989
        %v1001 = vmul.f32 %v981, %v989
        %v1002 = vmul.f32 %v982, %v989
        %v1003 = vmul.f32 %v983, %v989
        %v1004 = vmul.f32 %v984, %v989
        %v1005 = vmul.f32 %v985, %v989
        %v1006 = vadd.f32 %v954, %v990
        %v1007 = vadd.f32 %v955, %v991
        %v1008 = vadd.f32 %v956, %v992
        %v1009 = vadd.f32 %v957, %v993
        %v1010 = vadd.f32 %v958, %v994
        %v1011 = vadd.f32 %v959, %v995
        %v1012 = vadd.f32 %v960, %v996
        %v1013 = vadd.f32 %v961, %v997
        %v1014 = vadd.f32 %v962, %v998
        %v1015 = vadd.f32 %v963, %v999
        %v1016 = vadd.f32 %v964, %v1000
        %v1017 = vadd.f32 %v965, %v1001
        %v1018 = vadd.f32 %v966, %v1002
        %v1019 = vadd.f32 %v967, %v1003
        %v1020 = vadd.f32 %v968, %v1004
        %v1021 = vadd.f32 %v969, %v1005
        %s1022 = scalar_lea.vmem [#allocation2], 48
        %v1023 = vld [vmem:[%s1022] sm:$0xff]
        %v1024 = vld [vmem:[%s1022 + $0x8] sm:$0xff]
        %v1025 = vld [vmem:[%s1022 + $0x18] sm:$0xff]
        %v1026 = vld [vmem:[%s1022 + $0x20] sm:$0xff]
        %v1027 = vld [vmem:[%s1022 + $0x30] sm:$0xff]
        %v1028 = vld [vmem:[%s1022 + $0x38] sm:$0xff]
        %v1029 = vld [vmem:[%s1022 + $0x48] sm:$0xff]
        %v1030 = vld [vmem:[%s1022 + $0x50] sm:$0xff]
        %v1031 = vld [vmem:[%s1022 + $0x60] sm:$0xff]
        %v1032 = vld [vmem:[%s1022 + $0x68] sm:$0xff]
        %v1033 = vld [vmem:[%s1022 + $0x78] sm:$0xff]
        %v1034 = vld [vmem:[%s1022 + $0x80] sm:$0xff]
        %v1035 = vld [vmem:[%s1022 + $0x90] sm:$0xff]
        %v1036 = vld [vmem:[%s1022 + $0x98] sm:$0xff]
        %v1037 = vld [vmem:[%s1022 + $0xa8] sm:$0xff]
        %v1038 = vld [vmem:[%s1022 + $0xb0] sm:$0xff]
        %v1039 = vlaneseq
        %v1040 = vshrl.u32 %v1039, 7
        %v1041 = vsub.s32 6, %v1040
        %v1042 = vrot.slane %v707, %v1041
        %v1043 = vmul.f32 %v1023, %v1042
        %v1044 = vmul.f32 %v1024, %v1042
        %v1045 = vmul.f32 %v1025, %v1042
        %v1046 = vmul.f32 %v1026, %v1042
        %v1047 = vmul.f32 %v1027, %v1042
        %v1048 = vmul.f32 %v1028, %v1042
        %v1049 = vmul.f32 %v1029, %v1042
        %v1050 = vmul.f32 %v1030, %v1042
        %v1051 = vmul.f32 %v1031, %v1042
        %v1052 = vmul.f32 %v1032, %v1042
        %v1053 = vmul.f32 %v1033, %v1042
        %v1054 = vmul.f32 %v1034, %v1042
        %v1055 = vmul.f32 %v1035, %v1042
        %v1056 = vmul.f32 %v1036, %v1042
        %v1057 = vmul.f32 %v1037, %v1042
        %v1058 = vmul.f32 %v1038, %v1042
        %v1059 = vadd.f32 %v1006, %v1043
        %v1060 = vadd.f32 %v1007, %v1044
        %v1061 = vadd.f32 %v1008, %v1045
        %v1062 = vadd.f32 %v1009, %v1046
        %v1063 = vadd.f32 %v1010, %v1047
        %v1064 = vadd.f32 %v1011, %v1048
        %v1065 = vadd.f32 %v1012, %v1049
        %v1066 = vadd.f32 %v1013, %v1050
        %v1067 = vadd.f32 %v1014, %v1051
        %v1068 = vadd.f32 %v1015, %v1052
        %v1069 = vadd.f32 %v1016, %v1053
        %v1070 = vadd.f32 %v1017, %v1054
        %v1071 = vadd.f32 %v1018, %v1055
        %v1072 = vadd.f32 %v1019, %v1056
        %v1073 = vadd.f32 %v1020, %v1057
        %v1074 = vadd.f32 %v1021, %v1058
        %v1075 = vld [vmem:[%s1022 + $0x1] sm:$0xff]
        %v1076 = vld [vmem:[%s1022 + $0x9] sm:$0xff]
        %v1077 = vld [vmem:[%s1022 + $0x19] sm:$0xff]
        %v1078 = vld [vmem:[%s1022 + $0x21] sm:$0xff]
        %v1079 = vld [vmem:[%s1022 + $0x31] sm:$0xff]
        %v1080 = vld [vmem:[%s1022 + $0x39] sm:$0xff]
        %v1081 = vld [vmem:[%s1022 + $0x49] sm:$0xff]
        %v1082 = vld [vmem:[%s1022 + $0x51] sm:$0xff]
        %v1083 = vld [vmem:[%s1022 + $0x61] sm:$0xff]
        %v1084 = vld [vmem:[%s1022 + $0x69] sm:$0xff]
        %v1085 = vld [vmem:[%s1022 + $0x79] sm:$0xff]
        %v1086 = vld [vmem:[%s1022 + $0x81] sm:$0xff]
        %v1087 = vld [vmem:[%s1022 + $0x91] sm:$0xff]
        %v1088 = vld [vmem:[%s1022 + $0x99] sm:$0xff]
        %v1089 = vld [vmem:[%s1022 + $0xa9] sm:$0xff]
        %v1090 = vld [vmem:[%s1022 + $0xb1] sm:$0xff]
        %v1091 = vlaneseq
        %v1092 = vshrl.u32 %v1091, 7
        %v1093 = vsub.s32 7, %v1092
        %v1094 = vrot.slane %v707, %v1093
        %v1095 = vmul.f32 %v1075, %v1094
        %v1096 = vmul.f32 %v1076, %v1094
        %v1097 = vmul.f32 %v1077, %v1094
        %v1098 = vmul.f32 %v1078, %v1094
        %v1099 = vmul.f32 %v1079, %v1094
        %v1100 = vmul.f32 %v1080, %v1094
        %v1101 = vmul.f32 %v1081, %v1094
        %v1102 = vmul.f32 %v1082, %v1094
        %v1103 = vmul.f32 %v1083, %v1094
        %v1104 = vmul.f32 %v1084, %v1094
        %v1105 = vmul.f32 %v1085, %v1094
        %v1106 = vmul.f32 %v1086, %v1094
        %v1107 = vmul.f32 %v1087, %v1094
        %v1108 = vmul.f32 %v1088, %v1094
        %v1109 = vmul.f32 %v1089, %v1094
        %v1110 = vmul.f32 %v1090, %v1094
        %v1111 = vadd.f32 %v1059, %v1095
        %v1112 = vadd.f32 %v1060, %v1096
        %v1113 = vadd.f32 %v1061, %v1097
        %v1114 = vadd.f32 %v1062, %v1098
        %v1115 = vadd.f32 %v1063, %v1099
        %v1116 = vadd.f32 %v1064, %v1100
        %v1117 = vadd.f32 %v1065, %v1101
        %v1118 = vadd.f32 %v1066, %v1102
        %v1119 = vadd.f32 %v1067, %v1103
        %v1120 = vadd.f32 %v1068, %v1104
        %v1121 = vadd.f32 %v1069, %v1105
        %v1122 = vadd.f32 %v1070, %v1106
        %v1123 = vadd.f32 %v1071, %v1107
        %v1124 = vadd.f32 %v1072, %v1108
        %v1125 = vadd.f32 %v1073, %v1109
        %v1126 = vadd.f32 %v1074, %v1110
        %v1127 = vld [vmem:[%s1022 + $0x2] sm:$0xff]
        %v1128 = vld [vmem:[%s1022 + $0xa] sm:$0xff]
        %v1129 = vld [vmem:[%s1022 + $0x1a] sm:$0xff]
        %v1130 = vld [vmem:[%s1022 + $0x22] sm:$0xff]
        %v1131 = vld [vmem:[%s1022 + $0x32] sm:$0xff]
        %v1132 = vld [vmem:[%s1022 + $0x3a] sm:$0xff]
        %v1133 = vld [vmem:[%s1022 + $0x4a] sm:$0xff]
        %v1134 = vld [vmem:[%s1022 + $0x52] sm:$0xff]
        %v1135 = vld [vmem:[%s1022 + $0x62] sm:$0xff]
        %v1136 = vld [vmem:[%s1022 + $0x6a] sm:$0xff]
        %v1137 = vld [vmem:[%s1022 + $0x7a] sm:$0xff]
        %v1138 = vld [vmem:[%s1022 + $0x82] sm:$0xff]
        %v1139 = vld [vmem:[%s1022 + $0x92] sm:$0xff]
        %v1140 = vld [vmem:[%s1022 + $0x9a] sm:$0xff]
        %v1141 = vld [vmem:[%s1022 + $0xaa] sm:$0xff]
        %v1142 = vld [vmem:[%s1022 + $0xb2] sm:$0xff]
        %v1143 = vlaneseq
        %v1144 = vshrl.u32 %v1143, 7
        %v1145 = vsub.s32 0, %v1144
        %v1146 = vrot.slane %v708, %v1145
        %v1147 = vmul.f32 %v1127, %v1146
        %v1148 = vmul.f32 %v1128, %v1146
        %v1149 = vmul.f32 %v1129, %v1146
        %v1150 = vmul.f32 %v1130, %v1146
        %v1151 = vmul.f32 %v1131, %v1146
        %v1152 = vmul.f32 %v1132, %v1146
        %v1153 = vmul.f32 %v1133, %v1146
        %v1154 = vmul.f32 %v1134, %v1146
        %v1155 = vmul.f32 %v1135, %v1146
        %v1156 = vmul.f32 %v1136, %v1146
        %v1157 = vmul.f32 %v1137, %v1146
        %v1158 = vmul.f32 %v1138, %v1146
        %v1159 = vmul.f32 %v1139, %v1146
        %v1160 = vmul.f32 %v1140, %v1146
        %v1161 = vmul.f32 %v1141, %v1146
        %v1162 = vmul.f32 %v1142, %v1146
        %v1163 = vadd.f32 %v1111, %v1147
        %v1164 = vadd.f32 %v1112, %v1148
        %v1165 = vadd.f32 %v1113, %v1149
        %v1166 = vadd.f32 %v1114, %v1150
        %v1167 = vadd.f32 %v1115, %v1151
        %v1168 = vadd.f32 %v1116, %v1152
        %v1169 = vadd.f32 %v1117, %v1153
        %v1170 = vadd.f32 %v1118, %v1154
        %v1171 = vadd.f32 %v1119, %v1155
        %v1172 = vadd.f32 %v1120, %v1156
        %v1173 = vadd.f32 %v1121, %v1157
        %v1174 = vadd.f32 %v1122, %v1158
        %v1175 = vadd.f32 %v1123, %v1159
        %v1176 = vadd.f32 %v1124, %v1160
        %v1177 = vadd.f32 %v1125, %v1161
        %v1178 = vadd.f32 %v1126, %v1162
        %v1179 = vld [vmem:[%s4] sm:$0x1]
        %v1181 = vlaneseq
        %v1182 = vshrl.u32 %v1181, 7
        %v1183 = vsub.s32 0, %v1182
        %v1184 = vrot.slane %v1179, %v1183
        %v1186 = vadd.f32 %v1163, %v1184
        %v1187 = vadd.f32 %v1164, %v1184
        %v1188 = vadd.f32 %v1165, %v1184
        %v1189 = vadd.f32 %v1166, %v1184
        %v1190 = vadd.f32 %v1167, %v1184
        %v1191 = vadd.f32 %v1168, %v1184
        %v1192 = vadd.f32 %v1169, %v1184
        %v1193 = vadd.f32 %v1170, %v1184
        %v1194 = vadd.f32 %v1171, %v1184
        %v1195 = vadd.f32 %v1172, %v1184
        %v1196 = vadd.f32 %v1173, %v1184
        %v1197 = vadd.f32 %v1174, %v1184
        %v1198 = vadd.f32 %v1175, %v1184
        %v1199 = vadd.f32 %v1176, %v1184
        %v1200 = vadd.f32 %v1177, %v1184
        %v1201 = vadd.f32 %v1178, %v1184
        %v1202 = vsub.f32 0.0, %v1186
        %v1203 = vsub.f32 0.0, %v1187
        %v1204 = vsub.f32 0.0, %v1188
        %v1205 = vsub.f32 0.0, %v1189
        %v1206 = vsub.f32 0.0, %v1190
        %v1207 = vsub.f32 0.0, %v1191
        %v1208 = vsub.f32 0.0, %v1192
        %v1209 = vsub.f32 0.0, %v1193
        %v1210 = vsub.f32 0.0, %v1194
        %v1211 = vsub.f32 0.0, %v1195
        %v1212 = vsub.f32 0.0, %v1196
        %v1213 = vsub.f32 0.0, %v1197
        %v1214 = vsub.f32 0.0, %v1198
        %v1215 = vsub.f32 0.0, %v1199
        %v1216 = vsub.f32 0.0, %v1200
        %v1217 = vsub.f32 0.0, %v1201
        %v1218 = vmul.f32 %v1202, 1.442695
        %v1219 = vpow.pop %v1218
        %v1220 = vmul.f32 %v1203, 1.442695
        %v1221 = vpow.pop %v1220
        %v1222 = vmul.f32 %v1204, 1.442695
        %v1223 = vpow.pop %v1222
        %v1224 = vmul.f32 %v1205, 1.442695
        %v1225 = vpow.pop %v1224
        %v1226 = vmul.f32 %v1206, 1.442695
        %v1227 = vpow.pop %v1226
        %v1228 = vmul.f32 %v1207, 1.442695
        %v1229 = vpow.pop %v1228
        %v1230 = vmul.f32 %v1208, 1.442695
        %v1231 = vpow.pop %v1230
        %v1232 = vmul.f32 %v1209, 1.442695
        %v1233 = vpow.pop %v1232
        %v1234 = vmul.f32 %v1210, 1.442695
        %v1235 = vpow.pop %v1234
        %v1236 = vmul.f32 %v1211, 1.442695
        %v1237 = vpow.pop %v1236
        %v1238 = vmul.f32 %v1212, 1.442695
        %v1239 = vpow.pop %v1238
        %v1240 = vmul.f32 %v1213, 1.442695
        %v1241 = vpow.pop %v1240
        %v1242 = vmul.f32 %v1214, 1.442695
        %v1243 = vpow.pop %v1242
        %v1244 = vmul.f32 %v1215, 1.442695
        %v1245 = vpow.pop %v1244
        %v1246 = vmul.f32 %v1216, 1.442695
        %v1247 = vpow.pop %v1246
        %v1248 = vmul.f32 %v1217, 1.442695
        %v1249 = vpow.pop %v1248
        %v1250 = vadd.f32 %v1219, 1.0
        %v1251 = vadd.f32 %v1221, 1.0
        %v1252 = vadd.f32 %v1223, 1.0
        %v1253 = vadd.f32 %v1225, 1.0
        %v1254 = vadd.f32 %v1227, 1.0
        %v1255 = vadd.f32 %v1229, 1.0
        %v1256 = vadd.f32 %v1231, 1.0
        %v1257 = vadd.f32 %v1233, 1.0
        %v1258 = vadd.f32 %v1235, 1.0
        %v1259 = vadd.f32 %v1237, 1.0
        %v1260 = vadd.f32 %v1239, 1.0
        %v1261 = vadd.f32 %v1241, 1.0
        %v1262 = vadd.f32 %v1243, 1.0
        %v1263 = vadd.f32 %v1245, 1.0
        %v1264 = vadd.f32 %v1247, 1.0
        %v1265 = vadd.f32 %v1249, 1.0
        %v1266 = vrcp.pop %v1250
        %v1267 = vrcp.pop %v1251
        %v1268 = vrcp.pop %v1252
        %v1269 = vrcp.pop %v1253
        %v1270 = vrcp.pop %v1254
        %v1271 = vrcp.pop %v1255
        %v1272 = vrcp.pop %v1256
        %v1273 = vrcp.pop %v1257
        %v1274 = vrcp.pop %v1258
        %v1275 = vrcp.pop %v1259
        %v1276 = vrcp.pop %v1260
        %v1277 = vrcp.pop %v1261
        %v1278 = vrcp.pop %v1262
        %v1279 = vrcp.pop %v1263
        %v1280 = vrcp.pop %v1264
        %v1281 = vrcp.pop %v1265
        %v1282 = vmul.f32 %v1186, %v1266
        %v1283 = vmul.f32 %v1187, %v1267
        %v1284 = vmul.f32 %v1188, %v1268
        %v1285 = vmul.f32 %v1189, %v1269
        %v1286 = vmul.f32 %v1190, %v1270
        %v1287 = vmul.f32 %v1191, %v1271
        %v1288 = vmul.f32 %v1192, %v1272
        %v1289 = vmul.f32 %v1193, %v1273
        %v1290 = vmul.f32 %v1194, %v1274
        %v1291 = vmul.f32 %v1195, %v1275
        %v1292 = vmul.f32 %v1196, %v1276
        %v1293 = vmul.f32 %v1197, %v1277
        %v1294 = vmul.f32 %v1198, %v1278
        %v1295 = vmul.f32 %v1199, %v1279
        %v1296 = vmul.f32 %v1200, %v1280
        %v1297 = vmul.f32 %v1201, %v1281
        %1298 = vst.msk [vmem:[%s262] sm:$0xff] %vm686, %v1282
        %1299 = vst.msk [vmem:[%s262 + $0x8] sm:$0xff] %vm686, %v1283
        %1300 = vst.msk [vmem:[%s262 + $0x10] sm:$0xff] %vm686, %v1284
        %1301 = vst.msk [vmem:[%s262 + $0x18] sm:$0xff] %vm686, %v1285
        %1302 = vst.msk [vmem:[%s262 + $0x20] sm:$0xff] %vm686, %v1286
        %1303 = vst.msk [vmem:[%s262 + $0x28] sm:$0xff] %vm686, %v1287
        %1304 = vst.msk [vmem:[%s262 + $0x30] sm:$0xff] %vm686, %v1288
        %1305 = vst.msk [vmem:[%s262 + $0x38] sm:$0xff] %vm686, %v1289
        %1306 = vst.msk [vmem:[%s262 + $0x40] sm:$0xff] %vm686, %v1290
        %1307 = vst.msk [vmem:[%s262 + $0x48] sm:$0xff] %vm686, %v1291
        %1308 = vst.msk [vmem:[%s262 + $0x50] sm:$0xff] %vm686, %v1292
        %1309 = vst.msk [vmem:[%s262 + $0x58] sm:$0xff] %vm686, %v1293
        %1310 = vst.msk [vmem:[%s262 + $0x60] sm:$0xff] %vm686, %v1294
        %1311 = vst.msk [vmem:[%s262 + $0x68] sm:$0xff] %vm686, %v1295
        %1312 = vst.msk [vmem:[%s262 + $0x70] sm:$0xff] %vm686, %v1296
        %1313 = vst.msk [vmem:[%s262 + $0x78] sm:$0xff] %vm686, %v1297
        %v1314 = vsel %vm686, %v1282, 0.0
        %v1315 = vsel %vm686, %v1284, 0.0
        %v1316 = vadd.f32 %v1314, %v1315
        %v1317 = vsel %vm686, %v1286, 0.0
        %v1318 = vadd.f32 %v1316, %v1317
        %v1319 = vsel %vm686, %v1288, 0.0
        %v1320 = vadd.f32 %v1318, %v1319
        %v1321 = vsel %vm686, %v1290, 0.0
        %v1322 = vadd.f32 %v1320, %v1321
        %v1323 = vsel %vm686, %v1292, 0.0
        %v1324 = vadd.f32 %v1322, %v1323
        %v1325 = vsel %vm686, %v1294, 0.0
        %v1326 = vadd.f32 %v1324, %v1325
        %v1327 = vsel %vm686, %v1296, 0.0
        %v1328 = vadd.f32 %v1326, %v1327
        %v1329 = vsel %vm686, %v1283, 0.0
        %v1330 = vsel %vm686, %v1285, 0.0
        %v1331 = vadd.f32 %v1329, %v1330
        %v1332 = vsel %vm686, %v1287, 0.0
        %v1333 = vadd.f32 %v1331, %v1332
        %v1334 = vsel %vm686, %v1289, 0.0
        %v1335 = vadd.f32 %v1333, %v1334
        %v1336 = vsel %vm686, %v1291, 0.0
        %v1337 = vadd.f32 %v1335, %v1336
        %v1338 = vsel %vm686, %v1293, 0.0
        %v1339 = vadd.f32 %v1337, %v1338
        %v1340 = vsel %vm686, %v1295, 0.0
        %v1341 = vadd.f32 %v1339, %v1340
        %v1342 = vsel %vm686, %v1297, 0.0
        %v1343 = vadd.f32 %v1341, %v1342
        %v1344 = vsel %vm686, %v1328, 0.0
        %v1345 = vsel %vm686, %v1343, 0.0
        %v1346 = vadd.f32 %v1344, %v1345
        %v1347 = vrot.slane %v1346, 4
        %v1348 = vadd.f32 %v1346, %v1347
        %v1349 = vrot.slane %v1348, 2
        %v1350 = vadd.f32 %v1348, %v1349
        %v1351 = vrot.slane %v1350, 1
        %v1352 = vadd.f32 %v1350, %v1351
        %p1353 = scmp.eq.s32.totalorder %s29, 0
        // Predicated region
        $region41: #{tpu_custom_call.1} parent=39 // pred_check
          %p1354 = pneg %p1353
        $region42: #{tpu_custom_call.1} parent=39 // pred_check_branch
          %1356 = sbr.rel (%p1354) target = $region44
        $region43: #{tpu_custom_call.1} parent=39 // pred_region
          %1357 = vst.msk [vmem:[%s268] sm:$0x1] %vm665, 0.0
        $region44: #{tpu_custom_call.1} parent=39 // pred_fallthru
          _
        %v1358 = vld [vmem:[%s268] sm:$0x1]
        %v1359 = vadd.f32 %v1358, %v1352
        %1360 = vst.msk [vmem:[%s268] sm:$0x1] %vm665, %v1359
        %s1361 = sand.u32 %s156, 1
        %s1362 = scalar_lea.sflag [#allocation4], %s1361
        %s1363 = sand.u32 %s156, 1
        %s1364 = smul.addr %s1363, 128
        %s1365 = scalar_lea.vmem [#allocation3], %s1364
        %s1366 = sand.u32 %s182, 1
        %s1367 = scalar_lea.sflag [#allocation6], %s1366
        %s1368 = sand.u32 %s182, 1
        %s1369 = scalar_lea.vmem [#allocation5], %s1368
        // Predicated region
        $region45: #{tpu_custom_call.1} parent=39 // pred_check
          %p1370 = pneg %p166
        $region46: #{tpu_custom_call.1} parent=39 // pred_check_branch
          %1372 = sbr.rel (%p1370) target = $region48
        $region47: #{tpu_custom_call.1} parent=39 // pred_region
          %s1373 = smul.u32 8, %s29
          %s1375 = ssub.s32 2048, 2048
          %1376 = vsyncadd %s1362, %s1375
          %s1377 = smul.addr %s1373, 2
          %s1378 = smul.addr %s28, 32
          %s1379 = sadd.s32 %s1377, %s1378
          %s1380 = smul.addr %s1379, 128
          %s1381 = scalar_lea.hbm %s5, %s1380
          %s1382 = sshll.u32 %s1365, 4
          %s1383 = int_to_ptr.vmem [resolvable:$true] %s1382
          %1388 = dma.vmem_to_hbm [thread:$0]  %s1383, 2048, %s1381, %s1362, 128, 128, 8
        $region48: #{tpu_custom_call.1} parent=39 // pred_fallthru
          _
        // Predicated region
        $region49: #{tpu_custom_call.1} parent=39 // pred_check
          %p1389 = pneg %p192
        $region50: #{tpu_custom_call.1} parent=39 // pred_check_branch
          %1391 = sbr.rel (%p1389) target = $region52
        $region51: #{tpu_custom_call.1} parent=39 // pred_region
          %s1393 = ssub.s32 16, 16
          %1394 = vsyncadd %s1367, %s1393
          %s1395 = smul.addr %s28, 16
          %s1396 = scalar_lea.hbm %s6, %s1395
          %s1398 = sshll.u32 %s1369, 4
          %s1399 = int_to_ptr.vmem [resolvable:$true] %s1398
          %1401 = dma.vmem_to_hbm [thread:$0]  %s1399, 16, %s1396, %s1367
        $region52: #{tpu_custom_call.1} parent=39 // pred_fallthru
          _
      $region40: #{tpu_custom_call.1} parent=5 // pred_fallthru
        _
      %p1402 = scmp.le.s32.totalorder 2, %s19
      // Predicated region
      $region53: #{tpu_custom_call.1} parent=5 // pred_check
        %p1403 = pneg %p1402
      $region54: #{tpu_custom_call.1} parent=5 // pred_check_branch
        %1405 = sbr.rel (%p1403) target = $region56
      $region55: #{tpu_custom_call.1} parent=5 // pred_region
        %s1406 = ssub.s32 %s19, 2
        // Predicated region
        $region57: #{tpu_custom_call.1} parent=55 // pred_check
          %p1407 = pneg %p172
        $region58: #{tpu_custom_call.1} parent=55 // pred_check_branch
          %1409 = sbr.rel (%p1407) target = $region60
        $region59: #{tpu_custom_call.1} parent=55 // pred_region
          %s1410 = sand.u32 %s157, 1
          %s1411 = scalar_lea.sflag [#allocation4], %s1410
          %s1412 = sand.u32 %s157, 1
          %s1413 = smul.addr %s1412, 128
          %s1414 = scalar_lea.vmem [#allocation3], %s1413
          %1415 = dma.done %s1411, 2048
        $region60: #{tpu_custom_call.1} parent=55 // pred_fallthru
          _
        // Predicated region
        $region61: #{tpu_custom_call.1} parent=55 // pred_check
          %p1416 = pneg %p198
        $region62: #{tpu_custom_call.1} parent=55 // pred_check_branch
          %1418 = sbr.rel (%p1416) target = $region64
        $region63: #{tpu_custom_call.1} parent=55 // pred_region
          %s1419 = sand.u32 %s183, 1
          %s1420 = scalar_lea.sflag [#allocation6], %s1419
          %s1421 = sand.u32 %s183, 1
          %s1422 = scalar_lea.vmem [#allocation5], %s1421
          %1423 = dma.done %s1420, 16
        $region64: #{tpu_custom_call.1} parent=55 // pred_fallthru
          _
      $region56: #{tpu_custom_call.1} parent=5 // pred_fallthru
        _
    $region6: #{tpu_custom_call.1} parent=1 // loop_footer
      %s23 = sadd.s32 1, %s19
    $region7: #{tpu_custom_call.1} parent=1 // loop_footer_branch
      %18 = sbr.rel target = $region3
    $region8: #{tpu_custom_call.1} parent=1 // loop_exit
      _
    %1424 = vsyncpa [#allocation4], 1
    %s1425 = scalar_lea.sflag [#allocation4], 1
    %1426 = vsyncpa %s1425, 1
    %1427 = vsyncpa [#allocation6], 1
    %s1428 = scalar_lea.sflag [#allocation6], 1
    %1429 = vsyncpa %s1428, 1

</llo_original>
